<compile_context>
chip_gen: v6e
topology: v6e:2x2x1
jax: 0.10.0
libtpu: 0.0.40
codegen_flags: <defaults>
</compile_context>

<pallas_src>
import functools

import jax
import jax.numpy as jnp
from jax.experimental import pallas as pl
from jax.experimental.pallas import tpu as pltpu


# ----------------------------------------------------------------------------
# Pallas kernel 1: 1-D conv along L (kernel 3, stride 1, pad 1) + channel mix.
# One grid step = one (batch, L-half) slab; the 3 taps are folded into a single
# MXU contraction (K = nt*Cin) per output position via static sublane slices.
# ----------------------------------------------------------------------------
def _conv_l_kernel(x_ref, w_ref, b_ref, o_ref, *, Lh, KT, Cin):
    # x_ref: (1, Lh*Cin, S) f32     -- whole half slab, (L, Cin) pre-flattened
    # w_ref: (Cout, KT*Cin) bf16    -- taps-major flattening (t*Cin + ci)
    # b_ref: (Cout, 1) f32
    # o_ref: (1, Lh, Cout, S) f32
    pad = KT // 2
    bias = b_ref[...]
    for ll in range(Lh):                      # tiny static loop, fully unrolled
        lo = max(ll - pad, 0)                 # boundary padding handled by
        hi = min(ll - pad + KT, Lh)           # truncating the contraction
        t0 = lo - (ll - pad)
        nt = hi - lo
        xt = x_ref[0, lo * Cin:hi * Cin, :].astype(jnp.bfloat16)   # (nt*Cin, S)
        wt = w_ref[:, t0 * Cin:(t0 + nt) * Cin]                    # (Cout, nt*Cin)
        acc = jnp.dot(wt, xt, preferred_element_type=jnp.float32)  # f32 accumulate
        o_ref[0, ll] = (acc + bias).astype(o_ref.dtype)            # lane-dense store


def conv_l3(x, w, b, *, n_halves=1):
    """Conv4d((3,1,1,1), stride 1, pad (1,0,0,0)) applied independently to each
    of the `n_halves` L-halves of x (matches the reference's per-half conv calls).

    x: (B, L, Cin, S) f32;  w: (Cout, Cin, KT);  b: (Cout,)  ->  (B, L, Cout, S) f32.
    """
    B, L, Cin, S = x.shape
    Cout, Cin2, KT = w.shape
    assert Cin == Cin2 and L % n_halves == 0
    Lh = L // n_halves
    xf = x.reshape(B, L * Cin, S)                    # contiguous-dim merge (free)
    # Flatten taps-major and pre-cast to bf16 ONCE (reused by every grid step).
    wf = jnp.transpose(w, (0, 2, 1)).reshape(Cout, KT * Cin).astype(jnp.bfloat16)
    b2 = b.reshape(Cout, 1).astype(jnp.float32)
    return pl.pallas_call(
        functools.partial(_conv_l_kernel, Lh=Lh, KT=KT, Cin=Cin),
        out_shape=jax.ShapeDtypeStruct((B, L, Cout, S), jnp.float32),
        grid=(B, n_halves),
        in_specs=[
            pl.BlockSpec((1, Lh * Cin, S), lambda bb, hh: (bb, hh, 0)),
            pl.BlockSpec((Cout, KT * Cin), lambda bb, hh: (0, 0)),
            pl.BlockSpec((Cout, 1), lambda bb, hh: (0, 0)),
        ],
        out_specs=pl.BlockSpec((1, Lh, Cout, S), lambda bb, hh: (bb, hh, 0, 0)),
        compiler_params=pltpu.CompilerParams(
            dimension_semantics=("parallel", "parallel")),
    )(xf, wf, b2)


# ----------------------------------------------------------------------------
# Pallas kernel 2: tiny-window attention with the group axis on lanes.
# Input is the fused (3, hd, window, G) tensor; q/k/v selection AND the
# cross-half K/V pairing are expressed purely in the BlockSpec index_maps.
# ----------------------------------------------------------------------------
def _win_attn_kernel(q_ref, k_ref, v_ref, o_ref, *, scale, hd):
    # q/k/v blocks: (1, hd, Wn, gb); o block: (hd, Wn, gb). Pure VPU math across
    # gb groups in lockstep; scores s[i, j, g] = scale * sum_d q[d,i,g] k[d,j,g].
    s = q_ref[0, 0][:, None, :] * k_ref[0, 0][None, :, :]
    for d in range(1, hd):
        s = s + q_ref[0, d][:, None, :] * k_ref[0, d][None, :, :]
    s = s * scale
    s = s - jnp.max(s, axis=1, keepdims=True)
    p = jnp.exp(s)
    p = p / jnp.sum(p, axis=1, keepdims=True)          # exact softmax normalization
    for d in range(hd):
        o_ref[d] = jnp.sum(p * v_ref[0, d][None, :, :], axis=1).astype(o_ref.dtype)


def win_attention(qkv, scale, *, n_halves=1, gb=256):
    """qkv: (3, hd, window, G) with G ordered (half, B, nl, nd, nh, nw, heads).

    Computes softmax(q_g k_{pair(g)}^T * scale) v_{pair(g)} per group g, where
    pair(g) is the SAME group in the OTHER half when n_halves == 2 (the half
    swap is a block-index rotation in the K/V index_maps, no data movement).
    """
    _, hd, Wn, G = qkv.shape
    G0 = G // n_halves
    gb = min(gb, G0)
    while G0 % gb:              # block size must divide the per-half group count
        gb //= 2
    nblk = G // gb
    shift = (G0 // gb) if n_halves > 1 else 0

    q_spec = pl.BlockSpec((1, hd, Wn, gb), lambda i: (0, 0, 0, i))
    k_spec = pl.BlockSpec((1, hd, Wn, gb), lambda i: (1, 0, 0, (i + shift) % nblk))
    v_spec = pl.BlockSpec((1, hd, Wn, gb), lambda i: (2, 0, 0, (i + shift) % nblk))
    return pl.pallas_call(
        functools.partial(_win_attn_kernel, scale=scale, hd=hd),
        out_shape=jax.ShapeDtypeStruct((hd, Wn, G), jnp.float32),
        grid=(nblk,),
        in_specs=[q_spec, k_spec, v_spec],
        out_specs=pl.BlockSpec((hd, Wn, gb), lambda i: (0, 0, i)),
        compiler_params=pltpu.CompilerParams(dimension_semantics=("parallel",)),
    )(qkv, qkv, qkv)


# ----------------------------------------------------------------------------
# Window (de)composition -- single layout pass each way (left to XLA).
# G axis ordered (half, B, nl, nd, nh, nw, heads) so the cross-half pairing is
# a simple rotation of the group-block index inside win_attention.
# ----------------------------------------------------------------------------
def to_windows_qkv(qkv, num_heads, local_size, n_halves, spatial):
    """(B, L, 3C, S) -> (3, hd, window, G)."""
    B, L, C3, S = qkv.shape
    D, H, W = spatial
    C = C3 // 3
    ls0, ls1, ls2, ls3 = local_size
    Lh = L // n_halves
    nl, nd, nh, nw = Lh // ls0, D // ls1, H // ls2, W // ls3
    hd = C // num_heads
    t = qkv.reshape(B, n_halves, nl, ls0, 3, num_heads, hd,
                    nd, ls1, nh, ls2, nw, ls3)
    t = t.transpose(4, 6, 3, 8, 10, 12, 1, 0, 2, 7, 9, 11, 5)
    return t.reshape(3, hd, ls0 * ls1 * ls2 * ls3,
                     n_halves * B * nl * nd * nh * nw * num_heads)


def from_windows(o, out_shape, num_heads, local_size, n_halves):
    """(hd, window, G) -> (B, L, C, D, H, W), inverse of to_windows_qkv (per q/k/v slice)."""
    B, L, C, D, H, W = out_shape
    ls0, ls1, ls2, ls3 = local_size
    Lh = L // n_halves
    nl, nd, nh, nw = Lh // ls0, D // ls1, H // ls2, W // ls3
    hd = C // num_heads
    o = o.reshape(hd, ls0, ls1, ls2, ls3, n_halves, B, nl, nd, nh, nw, num_heads)
    o = o.transpose(6, 5, 7, 1, 11, 0, 8, 2, 9, 3, 10, 4)
    return o.reshape(B, L, C, D, H, W)


# ----------------------------------------------------------------------------
# TLGAttention forward
# ----------------------------------------------------------------------------
def tlg_attention(x, params, *, num_heads, local_size, stage, qk_scale=None):
    B, L, C, D, H, W = x.shape
    S = D * H * W
    hd = C // num_heads
    scale = qk_scale if qk_scale is not None else hd ** (-0.5)
    n_halves = 2 if stage < 2 else 1

    x4 = x.reshape(B, L, C, S)
    qkv = conv_l3(x4, params['qkv_w'], params['qkv_b'], n_halves=n_halves)   # (B,L,3C,S)
    qkv_w = to_windows_qkv(qkv, num_heads, local_size, n_halves, (D, H, W))  # (3,hd,win,G)
    ow = win_attention(qkv_w, scale, n_halves=n_halves)                      # (hd,win,G)
    y = from_windows(ow, (B, L, C, D, H, W), num_heads, local_size, n_halves)
    y = conv_l3(y.reshape(B, L, C, S), params['proj_w'], params['proj_b'],
                n_halves=n_halves)                                           # (B,L,C,S)
    return y.reshape(B, L, C, D, H, W)


# ----------------------------------------------------------------------------
# Pure-JAX reference (direct translation of the PyTorch module) for self-check.
# ----------------------------------------------------------------------------
def _reference_forward(x, params, *, num_heads, local_size, stage, qk_scale=None):
    B, L, C, D, H, W = x.shape
    hd = C // num_heads
    scale = qk_scale if qk_scale is not None else hd ** (-0.5)
    ls0, ls1, ls2, ls3 = local_size

    def conv4d(xx, w, b):
        Bz, Lz = xx.shape[0], xx.shape[1]
        xp = jnp.pad(xx, ((0, 0), (1, 1), (0, 0), (0, 0), (0, 0), (0, 0)))
        out = jnp.zeros((Bz, Lz, w.shape[0], D, H, W), jnp.float32)
        for t in range(3):
            out = out + jnp.einsum('blcdhw,oc->blodhw', xp[:, t:t + Lz], w[:, :, t])
        return out + b.reshape(1, 1, -1, 1, 1, 1)

    def windows(t):
        Bz, Lz = t.shape[0], t.shape[1]
        nl, nd, nh, nw = Lz // ls0, D // ls1, H // ls2, W // ls3
        t = t.transpose(0, 2, 1, 3, 4, 5)
        t = t.reshape(Bz, C, nl, ls0, nd, ls1, nh, ls2, nw, ls3)
        t = t.transpose(0, 2, 4, 6, 8, 3, 5, 7, 9, 1)
        t = t.reshape(Bz, nl * nd * nh * nw, ls0 * ls1 * ls2 * ls3, num_heads, hd)
        return t.transpose(0, 1, 3, 2, 4)

    def unwindows(y, Lz):
        nl, nd, nh, nw = Lz // ls0, D // ls1, H // ls2, W // ls3
        y = y.transpose(0, 1, 3, 2, 4)
        y = y.reshape(B, nl, nd, nh, nw, ls0, ls1, ls2, ls3, C)
        y = y.transpose(0, 9, 1, 5, 2, 6, 3, 7, 4, 8)
        y = y.reshape(B, C, Lz, D, H, W)
        return y.transpose(0, 2, 1, 3, 4, 5)

    def attn(q, k, v):
        s = jnp.einsum('bghid,bghjd->bghij', q, k) * scale
        p = jax.nn.softmax(s, axis=-1)
        return jnp.einsum('bghij,bghjd->bghid', p, v)

    qw, qb = params['qkv_w'][:C], params['qkv_b'][:C]
    kw, kb = params['qkv_w'][C:2 * C], params['qkv_b'][C:2 * C]
    vw, vb = params['qkv_w'][2 * C:], params['qkv_b'][2 * C:]
    pw, pb = params['proj_w'], params['proj_b']

    if stage < 2:
        Lh = L // 2
        xs, xe = x[:, :Lh], x[:, Lh:]
        qs, ke, ve = windows(conv4d(xs, qw, qb)), windows(conv4d(xe, kw, kb)), windows(conv4d(xe, vw, vb))
        yse = conv4d(unwindows(attn(qs, ke, ve), Lh), pw, pb)
        qe, ks, vs = windows(conv4d(xe, qw, qb)), windows(conv4d(xs, kw, kb)), windows(conv4d(xs, vw, vb))
        yes = conv4d(unwindows(attn(qe, ks, vs), Lh), pw, pb)
        return jnp.concatenate([yse, yes], axis=1)
    q, k, v = windows(conv4d(x, qw, qb)), windows(conv4d(x, kw, kb)), windows(conv4d(x, vw, vb))
    return conv4d(unwindows(attn(q, k, v), L), pw, pb)


# ----------------------------------------------------------------------------
if __name__ == "__main__":
    B, dim, num_heads = 2, 16, 8
    local_size = (1, 2, 2, 2)
    L, D, H, W = 4, 8, 8, 8

    key = jax.random.PRNGKey(0)
    kx, kq, kk, kv, kp = jax.random.split(key, 5)
    x = jax.random.normal(kx, (B, L, dim, D, H, W), dtype=jnp.float32)

    def conv_init(k, cin, cout, kt=3):
        k_w, k_b = jax.random.split(k)
        w = jax.random.normal(k_w, (cout, cin, kt), jnp.float32) / (cin * kt) ** 0.5
        b = 0.02 * jax.random.normal(k_b, (cout,), jnp.float32)
        return w, b

    q_w, q_b = conv_init(kq, dim, dim)
    k_w, k_b = conv_init(kk, dim, dim)
    v_w, v_b = conv_init(kv, dim, dim)
    p_w, p_b = conv_init(kp, dim, dim)
    params = dict(
        qkv_w=jnp.concatenate([q_w, k_w, v_w], axis=0),   # fused q|k|v: (3C, C, 3)
        qkv_b=jnp.concatenate([q_b, k_b, v_b], axis=0),   # (3C,)
        proj_w=p_w, proj_b=p_b,
    )

    for stage in (0, 2):
        fwd = jax.jit(functools.partial(tlg_attention, num_heads=num_heads,
                                        local_size=local_size, stage=stage))
        y = jax.block_until_ready(fwd(x, params))
        assert y.shape == x.shape, (y.shape, x.shape)
        assert bool(jnp.all(jnp.isfinite(y)))
        y_ref = _reference_forward(x, params, num_heads=num_heads,
                                   local_size=local_size, stage=stage)
        err = float(jnp.max(jnp.abs(y - y_ref)))
        # bf16 MXU operands (f32 accumulation) bound the deviation well below this.
        assert err < 0.15, f"stage={stage}: max abs diff vs reference = {err}"
    print("KERNEL_OK")
</pallas_src>

<mosaic_0001>
module attributes {stable_mosaic.version = 11 : i64} {
  func.func @_conv_l_kernel(%arg0: i32, %arg1: i32, %arg2: memref<1x32x512xf32, #tpu.memory_space<vmem>>, %arg3: memref<48x48xbf16, #tpu.memory_space<vmem>>, %arg4: memref<48x1xf32, #tpu.memory_space<vmem>>, %arg5: memref<1x2x48x512xf32, #tpu.memory_space<vmem>>) attributes {dimension_semantics = [#tpu.dimension_semantics<parallel>, #tpu.dimension_semantics<parallel>], iteration_bounds = array<i64: 2, 2>, scalar_prefetch = 0 : i64, scratch_operands = 0 : i64, tpu.core_type = #tpu.core_type<tc>, window_params = [{transform_indices = @transform_0, window_bounds = array<i64: 1, 32, 512>}, {pipeline_mode = #tpu.pipeline_mode<synchronous>, transform_indices = @transform_1, window_bounds = array<i64: 48, 48>}, {pipeline_mode = #tpu.pipeline_mode<synchronous>, transform_indices = @transform_2, window_bounds = array<i64: 48, 1>}, {transform_indices = @transform_3, window_bounds = array<i64: 1, 2, 48, 512>}]} {
    %c0 = arith.constant 0 : index
    %c0_0 = arith.constant 0 : index
    %0 = vector.load %arg4[%c0, %c0_0] : memref<48x1xf32, #tpu.memory_space<vmem>>, vector<48x1xf32>
    %c0_1 = arith.constant 0 : index
    %c0_2 = arith.constant 0 : index
    %c0_3 = arith.constant 0 : index
    %1 = vector.load %arg2[%c0_1, %c0_2, %c0_3] : memref<1x32x512xf32, #tpu.memory_space<vmem>>, vector<1x32x512xf32>
    %2 = vector.shape_cast %1 : vector<1x32x512xf32> to vector<32x512xf32>
    %3 = arith.truncf %2 : vector<32x512xf32> to vector<32x512xbf16>
    %c0_4 = arith.constant 0 : index
    %c16 = arith.constant 16 : index
    %4 = vector.load %arg3[%c0_4, %c16] : memref<48x48xbf16, #tpu.memory_space<vmem>>, vector<48x32xbf16>
    %cst = arith.constant dense<0.000000e+00> : vector<48x512xf32>
    %5 = tpu.matmul %4, %3, %cst {dimension_numbers = #tpu.dot_dimension_numbers<[1], [0], [0], [1], [0, 0, 1, 1], [], []>} : vector<48x32xbf16>, vector<32x512xbf16>, vector<48x512xf32> -> vector<48x512xf32>
    %6 = vector.broadcast %0 : vector<48x1xf32> to vector<48x512xf32>
    %7 = arith.addf %5, %6 : vector<48x512xf32>
    %c0_5 = arith.constant 0 : index
    %c0_6 = arith.constant 0 : index
    %c0_7 = arith.constant 0 : index
    %c0_8 = arith.constant 0 : index
    %8 = vector.load %arg5[%c0_5, %c0_6, %c0_7, %c0_8] : memref<1x2x48x512xf32, #tpu.memory_space<vmem>>, vector<1x1x48x512xf32>
    %9 = vector.shape_cast %8 : vector<1x1x48x512xf32> to vector<48x512xf32>
    %10 = vector.shape_cast %7 : vector<48x512xf32> to vector<1x1x48x512xf32>
    tpu.vector_store %arg5[%c0_5, %c0_6, %c0_7, %c0_8], %10 {strides = array<i32>} : memref<1x2x48x512xf32, #tpu.memory_space<vmem>>, vector<1x1x48x512xf32>,
    %c0_9 = arith.constant 0 : index
    %c0_10 = arith.constant 0 : index
    %c0_11 = arith.constant 0 : index
    %11 = vector.load %arg2[%c0_9, %c0_10, %c0_11] : memref<1x32x512xf32, #tpu.memory_space<vmem>>, vector<1x32x512xf32>
    %12 = vector.shape_cast %11 : vector<1x32x512xf32> to vector<32x512xf32>
    %13 = arith.truncf %12 : vector<32x512xf32> to vector<32x512xbf16>
    %c0_12 = arith.constant 0 : index
    %c0_13 = arith.constant 0 : index
    %14 = vector.load %arg3[%c0_12, %c0_13] : memref<48x48xbf16, #tpu.memory_space<vmem>>, vector<48x32xbf16>
    %cst_14 = arith.constant dense<0.000000e+00> : vector<48x512xf32>
    %15 = tpu.matmul %14, %13, %cst_14 {dimension_numbers = #tpu.dot_dimension_numbers<[1], [0], [0], [1], [0, 0, 1, 1], [], []>} : vector<48x32xbf16>, vector<32x512xbf16>, vector<48x512xf32> -> vector<48x512xf32>
    %16 = vector.broadcast %0 : vector<48x1xf32> to vector<48x512xf32>
    %17 = arith.addf %15, %16 : vector<48x512xf32>
    %c0_15 = arith.constant 0 : index
    %c1 = arith.constant 1 : index
    %c0_16 = arith.constant 0 : index
    %c0_17 = arith.constant 0 : index
    %18 = vector.load %arg5[%c0_15, %c1, %c0_16, %c0_17] : memref<1x2x48x512xf32, #tpu.memory_space<vmem>>, vector<1x1x48x512xf32>
    %19 = vector.shape_cast %18 : vector<1x1x48x512xf32> to vector<48x512xf32>
    %20 = vector.shape_cast %17 : vector<48x512xf32> to vector<1x1x48x512xf32>
    tpu.vector_store %arg5[%c0_15, %c1, %c0_16, %c0_17], %20 {strides = array<i32>} : memref<1x2x48x512xf32, #tpu.memory_space<vmem>>, vector<1x1x48x512xf32>,
    return
  }
  func.func @transform_0(%arg0: i32, %arg1: i32) -> (i32, i32, i32) {
    %c0_i32 = arith.constant 0 : i32
    %c0_i32_0 = arith.constant 0 : i32
    return %arg0, %arg1, %c0_i32 : i32, i32, i32
  }
  func.func @transform_1(%arg0: i32, %arg1: i32) -> (i32, i32) {
    %c0_i32 = arith.constant 0 : i32
    %c0_i32_0 = arith.constant 0 : i32
    %c0_i32_1 = arith.constant 0 : i32
    return %c0_i32, %c0_i32_0 : i32, i32
  }
  func.func @transform_2(%arg0: i32, %arg1: i32) -> (i32, i32) {
    %c0_i32 = arith.constant 0 : i32
    %c0_i32_0 = arith.constant 0 : i32
    %c0_i32_1 = arith.constant 0 : i32
    return %c0_i32, %c0_i32_0 : i32, i32
  }
  func.func @transform_3(%arg0: i32, %arg1: i32) -> (i32, i32, i32, i32) {
    %c0_i32 = arith.constant 0 : i32
    %c0_i32_0 = arith.constant 0 : i32
    %c0_i32_1 = arith.constant 0 : i32
    return %arg0, %arg1, %c0_i32, %c0_i32_0 : i32, i32, i32, i32
  }
}

module attributes {stable_mosaic.version = 11 : i64} {
  func.func @_win_attn_kernel(%arg0: i32, %arg1: memref<1x2x8x256xf32, #tpu.memory_space<vmem>>, %arg2: memref<1x2x8x256xf32, #tpu.memory_space<vmem>>, %arg3: memref<1x2x8x256xf32, #tpu.memory_space<vmem>>, %arg4: memref<2x8x256xf32, #tpu.memory_space<vmem>>) attributes {dimension_semantics = [#tpu.dimension_semantics<parallel>], iteration_bounds = array<i64: 16>, scalar_prefetch = 0 : i64, scratch_operands = 0 : i64, tpu.core_type = #tpu.core_type<tc>, window_params = [{transform_indices = @transform_0, window_bounds = array<i64: 1, 2, 8, 256>}, {transform_indices = @transform_1, window_bounds = array<i64: 1, 2, 8, 256>}, {transform_indices = @transform_2, window_bounds = array<i64: 1, 2, 8, 256>}, {transform_indices = @transform_3, window_bounds = array<i64: 2, 8, 256>}]} {
    %c0 = arith.constant 0 : index
    %c0_0 = arith.constant 0 : index
    %c0_1 = arith.constant 0 : index
    %c0_2 = arith.constant 0 : index
    %0 = vector.load %arg1[%c0, %c0_0, %c0_1, %c0_2] : memref<1x2x8x256xf32, #tpu.memory_space<vmem>>, vector<1x1x8x256xf32>
    %1 = vector.shape_cast %0 : vector<1x1x8x256xf32> to vector<8x256xf32>
    %2 = vector.shape_cast %1 : vector<8x256xf32> to vector<8x1x256xf32>
    %c0_3 = arith.constant 0 : index
    %c0_4 = arith.constant 0 : index
    %c0_5 = arith.constant 0 : index
    %c0_6 = arith.constant 0 : index
    %3 = vector.load %arg2[%c0_3, %c0_4, %c0_5, %c0_6] : memref<1x2x8x256xf32, #tpu.memory_space<vmem>>, vector<1x1x8x256xf32>
    %4 = vector.shape_cast %3 : vector<1x1x8x256xf32> to vector<8x256xf32>
    %5 = vector.shape_cast %4 : vector<8x256xf32> to vector<1x8x256xf32>
    %6 = vector.broadcast %2 : vector<8x1x256xf32> to vector<8x8x256xf32>
    %7 = vector.broadcast %5 : vector<1x8x256xf32> to vector<8x8x256xf32>
    %8 = arith.mulf %6, %7 : vector<8x8x256xf32>
    %c0_7 = arith.constant 0 : index
    %c1 = arith.constant 1 : index
    %c0_8 = arith.constant 0 : index
    %c0_9 = arith.constant 0 : index
    %9 = vector.load %arg1[%c0_7, %c1, %c0_8, %c0_9] : memref<1x2x8x256xf32, #tpu.memory_space<vmem>>, vector<1x1x8x256xf32>
    %10 = vector.shape_cast %9 : vector<1x1x8x256xf32> to vector<8x256xf32>
    %11 = vector.shape_cast %10 : vector<8x256xf32> to vector<8x1x256xf32>
    %c0_10 = arith.constant 0 : index
    %c1_11 = arith.constant 1 : index
    %c0_12 = arith.constant 0 : index
    %c0_13 = arith.constant 0 : index
    %12 = vector.load %arg2[%c0_10, %c1_11, %c0_12, %c0_13] : memref<1x2x8x256xf32, #tpu.memory_space<vmem>>, vector<1x1x8x256xf32>
    %13 = vector.shape_cast %12 : vector<1x1x8x256xf32> to vector<8x256xf32>
    %14 = vector.shape_cast %13 : vector<8x256xf32> to vector<1x8x256xf32>
    %15 = vector.broadcast %11 : vector<8x1x256xf32> to vector<8x8x256xf32>
    %16 = vector.broadcast %14 : vector<1x8x256xf32> to vector<8x8x256xf32>
    %17 = arith.mulf %15, %16 : vector<8x8x256xf32>
    %18 = arith.addf %8, %17 : vector<8x8x256xf32>
    %cst = arith.constant 0.707106769 : f32
    %19 = vector.broadcast %cst : f32 to vector<8x8x256xf32>
    %20 = arith.mulf %18, %19 : vector<8x8x256xf32>
    %cst_14 = arith.constant dense<0xFF800000> : vector<8x256xf32>
    %21 = vector.multi_reduction <maximumf>, %20, %cst_14 [1] : vector<8x8x256xf32> to vector<8x256xf32>
    %22 = vector.shape_cast %21 : vector<8x256xf32> to vector<8x1x256xf32>
    %23 = vector.broadcast %22 : vector<8x1x256xf32> to vector<8x8x256xf32>
    %24 = arith.subf %20, %23 : vector<8x8x256xf32>
    %25 = math.exp %24 : vector<8x8x256xf32>
    %cst_15 = arith.constant dense<0.000000e+00> : vector<8x256xf32>
    %26 = vector.multi_reduction <add>, %25, %cst_15 [1] : vector<8x8x256xf32> to vector<8x256xf32>
    %27 = vector.shape_cast %26 : vector<8x256xf32> to vector<8x1x256xf32>
    %28 = vector.broadcast %27 : vector<8x1x256xf32> to vector<8x8x256xf32>
    %29 = arith.divf %25, %28 : vector<8x8x256xf32>
    %c0_16 = arith.constant 0 : index
    %c0_17 = arith.constant 0 : index
    %c0_18 = arith.constant 0 : index
    %c0_19 = arith.constant 0 : index
    %30 = vector.load %arg3[%c0_16, %c0_17, %c0_18, %c0_19] : memref<1x2x8x256xf32, #tpu.memory_space<vmem>>, vector<1x1x8x256xf32>
    %31 = vector.shape_cast %30 : vector<1x1x8x256xf32> to vector<8x256xf32>
    %32 = vector.shape_cast %31 : vector<8x256xf32> to vector<1x8x256xf32>
    %33 = vector.broadcast %32 : vector<1x8x256xf32> to vector<8x8x256xf32>
    %34 = arith.mulf %29, %33 : vector<8x8x256xf32>
    %cst_20 = arith.constant dense<0.000000e+00> : vector<8x256xf32>
    %35 = vector.multi_reduction <add>, %34, %cst_20 [1] : vector<8x8x256xf32> to vector<8x256xf32>
    %c0_21 = arith.constant 0 : index
    %c0_22 = arith.constant 0 : index
    %c0_23 = arith.constant 0 : index
    %36 = vector.load %arg4[%c0_21, %c0_22, %c0_23] : memref<2x8x256xf32, #tpu.memory_space<vmem>>, vector<1x8x256xf32>
    %37 = vector.shape_cast %36 : vector<1x8x256xf32> to vector<8x256xf32>
    %38 = vector.shape_cast %35 : vector<8x256xf32> to vector<1x8x256xf32>
    tpu.vector_store %arg4[%c0_21, %c0_22, %c0_23], %38 {strides = array<i32>} : memref<2x8x256xf32, #tpu.memory_space<vmem>>, vector<1x8x256xf32>,
    %c0_24 = arith.constant 0 : index
    %c1_25 = arith.constant 1 : index
    %c0_26 = arith.constant 0 : index
    %c0_27 = arith.constant 0 : index
    %39 = vector.load %arg3[%c0_24, %c1_25, %c0_26, %c0_27] : memref<1x2x8x256xf32, #tpu.memory_space<vmem>>, vector<1x1x8x256xf32>
    %40 = vector.shape_cast %39 : vector<1x1x8x256xf32> to vector<8x256xf32>
    %41 = vector.shape_cast %40 : vector<8x256xf32> to vector<1x8x256xf32>
    %42 = vector.broadcast %41 : vector<1x8x256xf32> to vector<8x8x256xf32>
    %43 = arith.mulf %29, %42 : vector<8x8x256xf32>
    %cst_28 = arith.constant dense<0.000000e+00> : vector<8x256xf32>
    %44 = vector.multi_reduction <add>, %43, %cst_28 [1] : vector<8x8x256xf32> to vector<8x256xf32>
    %c1_29 = arith.constant 1 : index
    %c0_30 = arith.constant 0 : index
    %c0_31 = arith.constant 0 : index
    %45 = vector.load %arg4[%c1_29, %c0_30, %c0_31] : memref<2x8x256xf32, #tpu.memory_space<vmem>>, vector<1x8x256xf32>
    %46 = vector.shape_cast %45 : vector<1x8x256xf32> to vector<8x256xf32>
    %47 = vector.shape_cast %44 : vector<8x256xf32> to vector<1x8x256xf32>
    tpu.vector_store %arg4[%c1_29, %c0_30, %c0_31], %47 {strides = array<i32>} : memref<2x8x256xf32, #tpu.memory_space<vmem>>, vector<1x8x256xf32>,
    return
  }
  func.func @transform_0(%arg0: i32) -> (i32, i32, i32, i32) {
    %c0_i32 = arith.constant 0 : i32
    %c0_i32_0 = arith.constant 0 : i32
    %c0_i32_1 = arith.constant 0 : i32
    %c0_i32_2 = arith.constant 0 : i32
    return %c0_i32, %c0_i32_0, %c0_i32_1, %arg0 : i32, i32, i32, i32
  }
  func.func @transform_1(%arg0: i32) -> (i32, i32, i32, i32) {
    %c8_i32 = arith.constant 8 : i32
    %0 = arith.addi %arg0, %c8_i32 : i32
    %c16_i32 = arith.constant 16 : i32
    %c0_i32 = arith.constant 0 : i32
    %1 = arith.cmpi eq, %c16_i32, %c0_i32 : i32
    %c1_i32 = arith.constant 1 : i32
    %2 = arith.select %1, %c1_i32, %c16_i32 : i32
    %3 = arith.remsi %0, %2 : i32
    %c0_i32_0 = arith.constant 0 : i32
    %4 = arith.cmpi ne, %3, %c0_i32_0 : i32
    %c0_i32_1 = arith.constant 0 : i32
    %5 = arith.cmpi slt, %3, %c0_i32_1 : i32
    %c0_i32_2 = arith.constant 0 : i32
    %6 = arith.cmpi slt, %2, %c0_i32_2 : i32
    %7 = arith.xori %5, %6 : i1
    %8 = arith.andi %7, %4 : i1
    %9 = arith.addi %3, %2 : i32
    %10 = arith.select %8, %9, %3 : i32
    %c1_i32_3 = arith.constant 1 : i32
    %c0_i32_4 = arith.constant 0 : i32
    %c0_i32_5 = arith.constant 0 : i32
    %c0_i32_6 = arith.constant 0 : i32
    return %c1_i32_3, %c0_i32_4, %c0_i32_5, %10 : i32, i32, i32, i32
  }
  func.func @transform_2(%arg0: i32) -> (i32, i32, i32, i32) {
    %c8_i32 = arith.constant 8 : i32
    %0 = arith.addi %arg0, %c8_i32 : i32
    %c16_i32 = arith.constant 16 : i32
    %c0_i32 = arith.constant 0 : i32
    %1 = arith.cmpi eq, %c16_i32, %c0_i32 : i32
    %c1_i32 = arith.constant 1 : i32
    %2 = arith.select %1, %c1_i32, %c16_i32 : i32
    %3 = arith.remsi %0, %2 : i32
    %c0_i32_0 = arith.constant 0 : i32
    %4 = arith.cmpi ne, %3, %c0_i32_0 : i32
    %c0_i32_1 = arith.constant 0 : i32
    %5 = arith.cmpi slt, %3, %c0_i32_1 : i32
    %c0_i32_2 = arith.constant 0 : i32
    %6 = arith.cmpi slt, %2, %c0_i32_2 : i32
    %7 = arith.xori %5, %6 : i1
    %8 = arith.andi %7, %4 : i1
    %9 = arith.addi %3, %2 : i32
    %10 = arith.select %8, %9, %3 : i32
    %c2_i32 = arith.constant 2 : i32
    %c0_i32_3 = arith.constant 0 : i32
    %c0_i32_4 = arith.constant 0 : i32
    %c0_i32_5 = arith.constant 0 : i32
    return %c2_i32, %c0_i32_3, %c0_i32_4, %10 : i32, i32, i32, i32
  }
  func.func @transform_3(%arg0: i32) -> (i32, i32, i32) {
    %c0_i32 = arith.constant 0 : i32
    %c0_i32_0 = arith.constant 0 : i32
    %c0_i32_1 = arith.constant 0 : i32
    return %c0_i32, %c0_i32_0, %arg0 : i32, i32, i32
  }
}

module attributes {stable_mosaic.version = 11 : i64} {
  func.func @_conv_l_kernel(%arg0: i32, %arg1: i32, %arg2: memref<1x32x512xf32, #tpu.memory_space<vmem>>, %arg3: memref<16x48xbf16, #tpu.memory_space<vmem>>, %arg4: memref<16x1xf32, #tpu.memory_space<vmem>>, %arg5: memref<1x2x16x512xf32, #tpu.memory_space<vmem>>) attributes {dimension_semantics = [#tpu.dimension_semantics<parallel>, #tpu.dimension_semantics<parallel>], iteration_bounds = array<i64: 2, 2>, scalar_prefetch = 0 : i64, scratch_operands = 0 : i64, tpu.core_type = #tpu.core_type<tc>, window_params = [{transform_indices = @transform_0, window_bounds = array<i64: 1, 32, 512>}, {pipeline_mode = #tpu.pipeline_mode<synchronous>, transform_indices = @transform_1, window_bounds = array<i64: 16, 48>}, {pipeline_mode = #tpu.pipeline_mode<synchronous>, transform_indices = @transform_2, window_bounds = array<i64: 16, 1>}, {transform_indices = @transform_3, window_bounds = array<i64: 1, 2, 16, 512>}]} {
    %c0 = arith.constant 0 : index
    %c0_0 = arith.constant 0 : index
    %0 = vector.load %arg4[%c0, %c0_0] : memref<16x1xf32, #tpu.memory_space<vmem>>, vector<16x1xf32>
    %c0_1 = arith.constant 0 : index
    %c0_2 = arith.constant 0 : index
    %c0_3 = arith.constant 0 : index
    %1 = vector.load %arg2[%c0_1, %c0_2, %c0_3] : memref<1x32x512xf32, #tpu.memory_space<vmem>>, vector<1x32x512xf32>
    %2 = vector.shape_cast %1 : vector<1x32x512xf32> to vector<32x512xf32>
    %3 = arith.truncf %2 : vector<32x512xf32> to vector<32x512xbf16>
    %c0_4 = arith.constant 0 : index
    %c16 = arith.constant 16 : index
    %4 = vector.load %arg3[%c0_4, %c16] : memref<16x48xbf16, #tpu.memory_space<vmem>>, vector<16x32xbf16>
    %cst = arith.constant dense<0.000000e+00> : vector<16x512xf32>
    %5 = tpu.matmul %4, %3, %cst {dimension_numbers = #tpu.dot_dimension_numbers<[1], [0], [0], [1], [0, 0, 1, 1], [], []>} : vector<16x32xbf16>, vector<32x512xbf16>, vector<16x512xf32> -> vector<16x512xf32>
    %6 = vector.broadcast %0 : vector<16x1xf32> to vector<16x512xf32>
    %7 = arith.addf %5, %6 : vector<16x512xf32>
    %c0_5 = arith.constant 0 : index
    %c0_6 = arith.constant 0 : index
    %c0_7 = arith.constant 0 : index
    %c0_8 = arith.constant 0 : index
    %8 = vector.load %arg5[%c0_5, %c0_6, %c0_7, %c0_8] : memref<1x2x16x512xf32, #tpu.memory_space<vmem>>, vector<1x1x16x512xf32>
    %9 = vector.shape_cast %8 : vector<1x1x16x512xf32> to vector<16x512xf32>
    %10 = vector.shape_cast %7 : vector<16x512xf32> to vector<1x1x16x512xf32>
    tpu.vector_store %arg5[%c0_5, %c0_6, %c0_7, %c0_8], %10 {strides = array<i32>} : memref<1x2x16x512xf32, #tpu.memory_space<vmem>>, vector<1x1x16x512xf32>,
    %c0_9 = arith.constant 0 : index
    %c0_10 = arith.constant 0 : index
    %c0_11 = arith.constant 0 : index
    %11 = vector.load %arg2[%c0_9, %c0_10, %c0_11] : memref<1x32x512xf32, #tpu.memory_space<vmem>>, vector<1x32x512xf32>
    %12 = vector.shape_cast %11 : vector<1x32x512xf32> to vector<32x512xf32>
    %13 = arith.truncf %12 : vector<32x512xf32> to vector<32x512xbf16>
    %c0_12 = arith.constant 0 : index
    %c0_13 = arith.constant 0 : index
    %14 = vector.load %arg3[%c0_12, %c0_13] : memref<16x48xbf16, #tpu.memory_space<vmem>>, vector<16x32xbf16>
    %cst_14 = arith.constant dense<0.000000e+00> : vector<16x512xf32>
    %15 = tpu.matmul %14, %13, %cst_14 {dimension_numbers = #tpu.dot_dimension_numbers<[1], [0], [0], [1], [0, 0, 1, 1], [], []>} : vector<16x32xbf16>, vector<32x512xbf16>, vector<16x512xf32> -> vector<16x512xf32>
    %16 = vector.broadcast %0 : vector<16x1xf32> to vector<16x512xf32>
    %17 = arith.addf %15, %16 : vector<16x512xf32>
    %c0_15 = arith.constant 0 : index
    %c1 = arith.constant 1 : index
    %c0_16 = arith.constant 0 : index
    %c0_17 = arith.constant 0 : index
    %18 = vector.load %arg5[%c0_15, %c1, %c0_16, %c0_17] : memref<1x2x16x512xf32, #tpu.memory_space<vmem>>, vector<1x1x16x512xf32>
    %19 = vector.shape_cast %18 : vector<1x1x16x512xf32> to vector<16x512xf32>
    %20 = vector.shape_cast %17 : vector<16x512xf32> to vector<1x1x16x512xf32>
    tpu.vector_store %arg5[%c0_15, %c1, %c0_16, %c0_17], %20 {strides = array<i32>} : memref<1x2x16x512xf32, #tpu.memory_space<vmem>>, vector<1x1x16x512xf32>,
    return
  }
  func.func @transform_0(%arg0: i32, %arg1: i32) -> (i32, i32, i32) {
    %c0_i32 = arith.constant 0 : i32
    %c0_i32_0 = arith.constant 0 : i32
    return %arg0, %arg1, %c0_i32 : i32, i32, i32
  }
  func.func @transform_1(%arg0: i32, %arg1: i32) -> (i32, i32) {
    %c0_i32 = arith.constant 0 : i32
    %c0_i32_0 = arith.constant 0 : i32
    %c0_i32_1 = arith.constant 0 : i32
    return %c0_i32, %c0_i32_0 : i32, i32
  }
  func.func @transform_2(%arg0: i32, %arg1: i32) -> (i32, i32) {
    %c0_i32 = arith.constant 0 : i32
    %c0_i32_0 = arith.constant 0 : i32
    %c0_i32_1 = arith.constant 0 : i32
    return %c0_i32, %c0_i32_0 : i32, i32
  }
  func.func @transform_3(%arg0: i32, %arg1: i32) -> (i32, i32, i32, i32) {
    %c0_i32 = arith.constant 0 : i32
    %c0_i32_0 = arith.constant 0 : i32
    %c0_i32_1 = arith.constant 0 : i32
    return %arg0, %arg1, %c0_i32, %c0_i32_0 : i32, i32, i32, i32
  }
}

</mosaic_0001>

<llo_original>
// kernel: tlg_attention.3
$region0: #{tlg_attention.3}
  #allocation0 [shape = 'u32[]', space=smem, size = 0x4, offset = 0x4, fixed_abs, tag = 'smem constant byte address 0x4 - core index']
  #allocation1 [shape = 'u32[144,128]{1,0:T(1,128)}', space=vmem, size = 0x12000, scoped, tag = 'internal scratch']
  %s0 = inlined_call_operand.vmem [shape: f32[2,64,512], index: 0, kind: input, shape index: {}]
  %s1 = inlined_call_operand.vmem [shape: bf16[48,48], index: 1, kind: input, shape index: {}]
  %s2 = inlined_call_operand.vmem [shape: f32[48,1], index: 2, kind: input, shape index: {}]
  %s3 = inlined_call_operand.vmem [shape: f32[2,4,48,512], index: 3, kind: output, shape index: {}]
  %s4 = sld [smem:[#allocation0]]
  $region45: #{tlg_attention.3} parent=0
    _
  %s6 = ssub.s32 1, %s4
  %s7 = scalar_select 0, %s6, %s4
  loop: start=0, step=1, limit=6
  $region2: #{tlg_attention.3} parent=0 // loop_pre_header
    _
  $region3: #{tlg_attention.3} parent=0 // loop_header
    %s9 = sphi 0, %s13
    %p10 = scmp.ge.s32.totalorder %s9, 6
    %s16 = sphi 0, %s28
    %s17 = sphi 0, %s24
    %s18 = sphi 0, %s16
    %s19 = sphi 0, %s17
    %s20 = sphi 0, %s18
    %s21 = sphi 0, %s19
    %s33 = sphi 0, %s35
    %s36 = sphi 0, %s33
    %s37 = sphi 0, %s36
    %s53 = sphi 0, %s37
    %s57 = sphi 0, %s57
    %s59 = sphi 0, %s57
    %s60 = sphi 0, %s59
    %s74 = sphi 0, %s60
    %s78 = sphi 0, %s78
    %s80 = sphi 0, %s78
    %s81 = sphi 0, %s80
    %s95 = sphi 0, %s81
    %s103 = sphi 0, %s105
    %s106 = sphi 0, %s103
    %s107 = sphi 0, %s106
    %s123 = sphi 0, %s107
  $region4: #{tlg_attention.3} parent=0 // loop_header_branch
    %12 = sbr.rel (%p10) target = $region8
  $region5: #{tlg_attention.3} parent=0 // loop_body
    %s14 = ssub.s32 %s9, 1
    %s15 = ssub.s32 %s9, 2
    %s22 = sadd.s32 1, %s17
    %p23 = scmp.ge.s32.totalorder %s22, 2
    %s24 = scalar_select %p23, 0, %s22
    %s25 = sadd.s32 1, %s16
    %s26 = scalar_select %p23, %s25, %s16
    %p27 = scmp.ge.s32.totalorder %s26, 2
    %s28 = scalar_select %p27, 0, %s26
    %s29 = ssub.s32 %s16, %s28
    %s30 = ssub.s32 %s17, %s24
    %s31 = sor.u32 %s29, %s30
    %p32 = scmp.eq.s32.totalorder %s31, 0
    %s34 = sadd.s32 %s33, 1
    %s35 = scalar_select %p32, %s33, %s34
    %p38 = pneg %p32
    %p39 = scmp.eq.s32.totalorder %s9, 3
    %p40 = por %p38, %p39
    %p41 = scmp.ne.s32.totalorder %s33, %s36
    %p42 = scmp.eq.s32.totalorder %s9, 0
    %p43 = por %p41, %p42
    %p44 = scmp.ne.s32.totalorder %s33, %s36
    %p45 = scmp.eq.s32.totalorder %s14, 3
    %p46 = por %p44, %p45
    %p47 = scmp.ne.s32.totalorder %s36, %s37
    %p48 = scmp.eq.s32.totalorder %s14, 0
    %p49 = por %p47, %p48
    %p50 = scmp.ne.s32.totalorder %s36, %s37
    %p51 = scmp.eq.s32.totalorder %s15, 3
    %p52 = por %p50, %p51
    %p54 = scmp.ne.s32.totalorder %s37, %s53
    %p55 = scmp.eq.s32.totalorder %s15, 0
    %p56 = por %p54, %p55
    %s58 = sadd.s32 %s57, 1
    %p61 = scmp.eq.s32.totalorder %s9, 3
    %p62 = scmp.ne.s32.totalorder %s57, %s59
    %p63 = scmp.eq.s32.totalorder %s9, 0
    %p64 = por %p62, %p63
    %p65 = scmp.ne.s32.totalorder %s57, %s59
    %p66 = scmp.eq.s32.totalorder %s14, 3
    %p67 = por %p65, %p66
    %p68 = scmp.ne.s32.totalorder %s59, %s60
    %p69 = scmp.eq.s32.totalorder %s14, 0
    %p70 = por %p68, %p69
    %p71 = scmp.ne.s32.totalorder %s59, %s60
    %p72 = scmp.eq.s32.totalorder %s15, 3
    %p73 = por %p71, %p72
    %p75 = scmp.ne.s32.totalorder %s60, %s74
    %p76 = scmp.eq.s32.totalorder %s15, 0
    %p77 = por %p75, %p76
    %s79 = sadd.s32 %s78, 1
    %p82 = scmp.eq.s32.totalorder %s9, 3
    %p83 = scmp.ne.s32.totalorder %s78, %s80
    %p84 = scmp.eq.s32.totalorder %s9, 0
    %p85 = por %p83, %p84
    %p86 = scmp.ne.s32.totalorder %s78, %s80
    %p87 = scmp.eq.s32.totalorder %s14, 3
    %p88 = por %p86, %p87
    %p89 = scmp.ne.s32.totalorder %s80, %s81
    %p90 = scmp.eq.s32.totalorder %s14, 0
    %p91 = por %p89, %p90
    %p92 = scmp.ne.s32.totalorder %s80, %s81
    %p93 = scmp.eq.s32.totalorder %s15, 3
    %p94 = por %p92, %p93
    %p96 = scmp.ne.s32.totalorder %s81, %s95
    %p97 = scmp.eq.s32.totalorder %s15, 0
    %p98 = por %p96, %p97
    %s99 = ssub.s32 %s16, %s28
    %s100 = ssub.s32 %s17, %s24
    %s101 = sor.u32 %s99, %s100
    %p102 = scmp.eq.s32.totalorder %s101, 0
    %s104 = sadd.s32 %s103, 1
    %s105 = scalar_select %p102, %s103, %s104
    %p108 = pneg %p102
    %p109 = scmp.eq.s32.totalorder %s9, 3
    %p110 = por %p108, %p109
    %p111 = scmp.ne.s32.totalorder %s103, %s106
    %p112 = scmp.eq.s32.totalorder %s9, 0
    %p113 = por %p111, %p112
    %p114 = scmp.ne.s32.totalorder %s103, %s106
    %p115 = scmp.eq.s32.totalorder %s14, 3
    %p116 = por %p114, %p115
    %p117 = scmp.ne.s32.totalorder %s106, %s107
    %p118 = scmp.eq.s32.totalorder %s14, 0
    %p119 = por %p117, %p118
    %p120 = scmp.ne.s32.totalorder %s106, %s107
    %p121 = scmp.eq.s32.totalorder %s15, 3
    %p122 = por %p120, %p121
    %p124 = scmp.ne.s32.totalorder %s107, %s123
    %p125 = scmp.eq.s32.totalorder %s15, 0
    %p126 = por %p124, %p125
    %p127 = scmp.le.s32.totalorder 1, %s9
    %p128 = scmp.lt.s32.totalorder %s9, 5
    %p129 = pnand %p127, %p128
    %p130 = pneg %p129
    // Predicated region
    $region9: #{tlg_attention.3} parent=5 // pred_check
      _
    $region10: #{tlg_attention.3} parent=5 // pred_check_branch
      %132 = sbr.rel (%p129) target = $region12
    $region11: #{tlg_attention.3} parent=5 // pred_region
      %s133 = ssub.s32 %s9, 1
      // Predicated region
      $region13: #{tlg_attention.3} parent=11 // pred_check
        %p134 = pneg %p70
      $region14: #{tlg_attention.3} parent=11 // pred_check_branch
        %136 = sbr.rel (%p134) target = $region16
      $region15: #{tlg_attention.3} parent=11 // pred_region
        _
      $region16: #{tlg_attention.3} parent=11 // pred_fallthru
        _
      // Predicated region
      $region17: #{tlg_attention.3} parent=11 // pred_check
        %p137 = pneg %p91
      $region18: #{tlg_attention.3} parent=11 // pred_check_branch
        %139 = sbr.rel (%p137) target = $region20
      $region19: #{tlg_attention.3} parent=11 // pred_region
        _
      $region20: #{tlg_attention.3} parent=11 // pred_fallthru
        _
    $region12: #{tlg_attention.3} parent=5 // pred_fallthru
      _
    %p140 = scmp.lt.s32.totalorder %s9, 4
    // Predicated region
    $region21: #{tlg_attention.3} parent=5 // pred_check
      %p141 = pneg %p140
    $region22: #{tlg_attention.3} parent=5 // pred_check_branch
      %143 = sbr.rel (%p141) target = $region24
    $region23: #{tlg_attention.3} parent=5 // pred_region
      // Predicated region
      $region25: #{tlg_attention.3} parent=23 // pred_check
        %p144 = pneg %p43
      $region26: #{tlg_attention.3} parent=23 // pred_check_branch
        %146 = sbr.rel (%p144) target = $region28
      $region27: #{tlg_attention.3} parent=23 // pred_region
        %s147 = smul.u32 4, %s17
        %p148 = scmp.lt.s32.totalorder %s16, 1
        %s149 = scalar_select %p148, %s16, 1
        %p150 = scmp.lt.s32.totalorder %s147, 7
        %s151 = scalar_select %p150, %s147, 7
        %s152 = smul.addr %s151, 4
        %s153 = smul.addr %s149, 32
        %s154 = sadd.s32 %s152, %s153
        %s155 = smul.addr %s154, 8
        %s156 = scalar_lea.vmem %s0, %s155
        %s157 = smul.u32 4, %s17
      $region28: #{tlg_attention.3} parent=23 // pred_fallthru
        _
    $region24: #{tlg_attention.3} parent=5 // pred_fallthru
      _
    %p158 = scmp.le.s32.totalorder 1, %s9
    %p159 = scmp.lt.s32.totalorder %s9, 5
    %p160 = pnand %p158, %p159
    %p161 = pneg %p160
    // Predicated region
    $region29: #{tlg_attention.3} parent=5 // pred_check
      _
    $region30: #{tlg_attention.3} parent=5 // pred_check_branch
      %163 = sbr.rel (%p160) target = $region32
    $region31: #{tlg_attention.3} parent=5 // pred_region
      %s164 = ssub.s32 %s9, 1
      %s165 = smul.u32 4, %s19
      %p166 = scmp.lt.s32.totalorder %s18, 1
      %s167 = scalar_select %p166, %s18, 1
      %p168 = scmp.lt.s32.totalorder %s165, 7
      %s169 = scalar_select %p168, %s165, 7
      %s170 = smul.addr %s169, 4
      %s171 = smul.addr %s167, 32
      %s172 = sadd.s32 %s170, %s171
      %s173 = smul.addr %s172, 8
      %s174 = scalar_lea.vmem %s0, %s173
      %p175 = pneg %p49
      %p176 = pneg %p46
      %p177 = pneg %p70
      %p178 = pneg %p67
      %p179 = pneg %p91
      %p180 = pneg %p88
      %p181 = pneg %p119
      %p182 = pneg %p116
      %s183 = smul.u32 2, %s19
      %p184 = scmp.lt.s32.totalorder %s18, 1
      %s185 = scalar_select %p184, %s18, 1
      %p186 = scmp.lt.s32.totalorder %s183, 3
      %s187 = scalar_select %p186, %s183, 3
      %s188 = smul.addr %s187, 24
      %s189 = smul.addr %s185, 96
      %s190 = sadd.s32 %s188, %s189
      %s191 = smul.addr %s190, 8
      %s192 = scalar_lea.vmem %s3, %s191
      %s193 = smul.u32 4, %s19
      %p194 = scmp.lt.s32.totalorder %s18, 1
      %s195 = scalar_select %p194, %s18, 1
      %p196 = scmp.lt.s32.totalorder %s193, 7
      %s197 = scalar_select %p196, %s193, 7
      %s198 = smul.addr %s197, 4
      %s199 = smul.addr %s195, 32
      %s200 = sadd.s32 %s198, %s199
      %s201 = smul.addr %s200, 8
      %s202 = scalar_lea.vmem %s0, %s201
      %s203 = smul.u32 4, %s19
      %s204 = smul.u32 2, %s19
      %p205 = scmp.lt.s32.totalorder %s18, 1
      %s206 = scalar_select %p205, %s18, 1
      %p207 = scmp.lt.s32.totalorder %s204, 3
      %s208 = scalar_select %p207, %s204, 3
      %s209 = smul.addr %s208, 24
      %s210 = smul.addr %s206, 96
      %s211 = sadd.s32 %s209, %s210
      %s212 = smul.addr %s211, 8
      %s213 = scalar_lea.vmem %s3, %s212
      %s214 = smul.u32 2, %s19
      %v216 = vld [vmem:[%s2] sm:$0xff]
      %v217 = vld [vmem:[%s2 + $0x8] sm:$0xff]
      %v218 = vld [vmem:[%s2 + $0x10] sm:$0xff]
      %v219 = vld [vmem:[%s2 + $0x18] sm:$0xff]
      %v220 = vld [vmem:[%s2 + $0x20] sm:$0xff]
      %v221 = vld [vmem:[%s2 + $0x28] sm:$0xff]
      %v222 = vld [vmem:[%s202] sm:$0xff]
      %v223 = vld [vmem:[%s202 + $0x8] sm:$0xff]
      %v224 = vld [vmem:[%s202 + $0x10] sm:$0xff]
      %v225 = vld [vmem:[%s202 + $0x18] sm:$0xff]
      %v226 = vld [vmem:[%s202 + $0x20] sm:$0xff]
      %v227 = vld [vmem:[%s202 + $0x28] sm:$0xff]
      %v228 = vld [vmem:[%s202 + $0x30] sm:$0xff]
      %v229 = vld [vmem:[%s202 + $0x38] sm:$0xff]
      %v230 = vld [vmem:[%s202 + $0x40] sm:$0xff]
      %v231 = vld [vmem:[%s202 + $0x48] sm:$0xff]
      %v232 = vld [vmem:[%s202 + $0x50] sm:$0xff]
      %v233 = vld [vmem:[%s202 + $0x58] sm:$0xff]
      %v234 = vld [vmem:[%s202 + $0x60] sm:$0xff]
      %v235 = vld [vmem:[%s202 + $0x68] sm:$0xff]
      %v236 = vld [vmem:[%s202 + $0x70] sm:$0xff]
      %v237 = vld [vmem:[%s202 + $0x78] sm:$0xff]
      %v238 = vpack.c.bf16 %v226, %v222
      %v239 = vpack.c.bf16 %v227, %v223
      %v240 = vpack.c.bf16 %v228, %v224
      %v241 = vpack.c.bf16 %v229, %v225
      %v242 = vpack.c.bf16 %v234, %v230
      %v243 = vpack.c.bf16 %v235, %v231
      %v244 = vpack.c.bf16 %v236, %v232
      %v245 = vpack.c.bf16 %v237, %v233
      %v246 = vld [vmem:[%s1] sm:$0xf]
      %v247 = vld [vmem:[%s1 + $0x4] sm:$0xf]
      %v248 = vld [vmem:[%s1 + $0x8] sm:$0xf]
      %v249 = vld [vmem:[%s1 + $0xc] sm:$0xf]
      %v250 = vld [vmem:[%s1 + $0x10] sm:$0xf]
      %v251 = vld [vmem:[%s1 + $0x14] sm:$0xf]
      %253 = vset.pattern.permute.xlu0 0
      %254 = vperm.xlu0 %253, %v216
      %v255 = vpop.permute.xlu0 %254
      %258 = vset.pattern.permute.xlu0 0
      %259 = vperm.xlu0 %258, %v217
      %v260 = vpop.permute.xlu0 %259
      %263 = vset.pattern.permute.xlu0 0
      %264 = vperm.xlu0 %263, %v218
      %v265 = vpop.permute.xlu0 %264
      %268 = vset.pattern.permute.xlu0 0
      %269 = vperm.xlu0 %268, %v219
      %v270 = vpop.permute.xlu0 %269
      %273 = vset.pattern.permute.xlu0 0
      %274 = vperm.xlu0 %273, %v220
      %v275 = vpop.permute.xlu0 %274
      %278 = vset.pattern.permute.xlu0 0
      %279 = vperm.xlu0 %278, %v221
      %v280 = vpop.permute.xlu0 %279
      %v288 = vunpack.c.l.b16 %v246
      %v289 = vunpack.c.l.b16 %v247
      %v290 = vunpack.c.l.b16 %v248
      %v291 = vunpack.c.l.b16 %v249
      %v292 = vunpack.c.l.b16 %v250
      %v293 = vunpack.c.l.b16 %v251
      %v294 = vpack.c.b16 %v289, %v288
      %v295 = vpack.c.b16 %v291, %v290
      %v296 = vpack.c.b16 %v293, %v292
      %297 = vrot.lane.b32.xlu0 %v294, 112
      %v298 = vpop.permute.xlu0 %297
      %299 = vrot.lane.b32.xlu0 %v295, 112
      %v300 = vpop.permute.xlu0 %299
      %301 = vrot.lane.b32.xlu0 %v296, 112
      %v302 = vpop.permute.xlu0 %301
      %vm303 = vcmask 261120
      %v305 = vsel %vm303, %v298, 0
      %v308 = vsel %vm303, %v300, 0
      %v311 = vsel %vm303, %v302, 0
      %313 = vmatprep.subr.bf16.mxu0 0
      %314 = vmatpush1.bf16.msra.mxu0 0
      %315 = vmatprep.subr.bf16.mxu0 0
      %316 = vmatpush1.bf16.msra.mxu0 0
      %317 = vmatprep.subr.bf16.mxu0 0
      %318 = vmatpush1.bf16.msra.mxu0 0
      %319 = vmatprep.subr.bf16.mxu0 0
      %320 = vmatpush1.bf16.msra.mxu0 0
      %321 = vmatprep.subr.bf16.mxu0 0
      %322 = vmatpush1.bf16.msra.mxu0 0
      %323 = vmatprep.subr.bf16.mxu0 0
      %324 = vmatpush1.bf16.msra.mxu0 0
      %325 = vmatprep.subr.bf16.mxu0 %v243
      %326 = vmatpush1.bf16.msra.mxu0 %v242
      %327 = vmatprep.subr.bf16.mxu0 %v239
      %328 = vmatpush1.bf16.msra.mxu0 %v238
      %329 = vmatprep.subr.bf16.mxu0 0
      %330 = vmatpush2.bf16.msra.mxu0 0
      %331 = vmatprep.subr.bf16.mxu0 0
      %332 = vmatpush2.bf16.msra.mxu0 0
      %333 = vmatprep.subr.bf16.mxu0 0
      %334 = vmatpush2.bf16.msra.mxu0 0
      %335 = vmatprep.subr.bf16.mxu0 0
      %336 = vmatpush2.bf16.msra.mxu0 0
      %337 = vmatprep.subr.bf16.mxu0 0
      %338 = vmatpush2.bf16.msra.mxu0 0
      %339 = vmatprep.subr.bf16.mxu0 0
      %340 = vmatpush2.bf16.msra.mxu0 0
      %341 = vmatprep.subr.bf16.mxu0 0
      %342 = vmatpush2.bf16.msra.mxu0 0
      %343 = vmatprep.subr.bf16.mxu0 0
      %344 = vmatpush2.bf16.msra.mxu0 0
      %345 = vmatprep.mubr.bf16.mxu0 0
      %346 = vmatmul.mubr.bf16.gmra.mxu0 %v305
      %v347 = vpop.f32.mrf.mxu0
      %v348 = vadd.f32 %v255, %v347
      %v349 = vpop.f32.mrf.mxu0
      %v350 = vadd.f32 %v255, %v349
      %v351 = vpop.f32.mrf.mxu0
      %v352 = vadd.f32 %v260, %v351
      %v353 = vpop.f32.mrf.mxu0
      %v354 = vadd.f32 %v260, %v353
      %355 = vmatprep.mubr.bf16.mxu0 0
      %356 = vmatmul.mubr.bf16.gmra.mxu0 %v308
      %v357 = vpop.f32.mrf.mxu0
      %v358 = vadd.f32 %v265, %v357
      %v359 = vpop.f32.mrf.mxu0
      %v360 = vadd.f32 %v265, %v359
      %v361 = vpop.f32.mrf.mxu0
      %v362 = vadd.f32 %v270, %v361
      %v363 = vpop.f32.mrf.mxu0
      %v364 = vadd.f32 %v270, %v363
      %365 = vmatprep.mubr.bf16.mxu0 0
      %366 = vmatmul.mubr.bf16.gmra.mxu0 %v311
      %v367 = vpop.f32.mrf.mxu0
      %v368 = vadd.f32 %v275, %v367
      %v369 = vpop.f32.mrf.mxu0
      %v370 = vadd.f32 %v275, %v369
      %v371 = vpop.f32.mrf.mxu0
      %v372 = vadd.f32 %v280, %v371
      %v373 = vpop.f32.mrf.mxu0
      %v374 = vadd.f32 %v280, %v373
      %375 = vdwg.mxu0
      %376 = vmatprep.subr.bf16.mxu0 0
      %377 = vmatpush1.bf16.msra.mxu0 0
      %378 = vmatprep.subr.bf16.mxu0 0
      %379 = vmatpush1.bf16.msra.mxu0 0
      %380 = vmatprep.subr.bf16.mxu0 0
      %381 = vmatpush1.bf16.msra.mxu0 0
      %382 = vmatprep.subr.bf16.mxu0 0
      %383 = vmatpush1.bf16.msra.mxu0 0
      %384 = vmatprep.subr.bf16.mxu0 0
      %385 = vmatpush1.bf16.msra.mxu0 0
      %386 = vmatprep.subr.bf16.mxu0 0
      %387 = vmatpush1.bf16.msra.mxu0 0
      %388 = vmatprep.subr.bf16.mxu0 %v245
      %389 = vmatpush1.bf16.msra.mxu0 %v244
      %390 = vmatprep.subr.bf16.mxu0 %v241
      %391 = vmatpush1.bf16.msra.mxu0 %v240
      %392 = vmatprep.subr.bf16.mxu0 0
      %393 = vmatpush2.bf16.msra.mxu0 0
      %394 = vmatprep.subr.bf16.mxu0 0
      %395 = vmatpush2.bf16.msra.mxu0 0
      %396 = vmatprep.subr.bf16.mxu0 0
      %397 = vmatpush2.bf16.msra.mxu0 0
      %398 = vmatprep.subr.bf16.mxu0 0
      %399 = vmatpush2.bf16.msra.mxu0 0
      %400 = vmatprep.subr.bf16.mxu0 0
      %401 = vmatpush2.bf16.msra.mxu0 0
      %402 = vmatprep.subr.bf16.mxu0 0
      %403 = vmatpush2.bf16.msra.mxu0 0
      %404 = vmatprep.subr.bf16.mxu0 0
      %405 = vmatpush2.bf16.msra.mxu0 0
      %406 = vmatprep.subr.bf16.mxu0 0
      %407 = vmatpush2.bf16.msra.mxu0 0
      %408 = vmatprep.mubr.bf16.mxu0 0
      %409 = vmatmul.mubr.bf16.gmra.mxu0 %v305
      %v410 = vpop.f32.mrf.mxu0
      %v411 = vadd.f32 %v255, %v410
      %v412 = vpop.f32.mrf.mxu0
      %v413 = vadd.f32 %v255, %v412
      %v414 = vpop.f32.mrf.mxu0
      %v415 = vadd.f32 %v260, %v414
      %v416 = vpop.f32.mrf.mxu0
      %v417 = vadd.f32 %v260, %v416
      %418 = vmatprep.mubr.bf16.mxu0 0
      %419 = vmatmul.mubr.bf16.gmra.mxu0 %v308
      %v420 = vpop.f32.mrf.mxu0
      %v421 = vadd.f32 %v265, %v420
      %v422 = vpop.f32.mrf.mxu0
      %v423 = vadd.f32 %v265, %v422
      %v424 = vpop.f32.mrf.mxu0
      %v425 = vadd.f32 %v270, %v424
      %v426 = vpop.f32.mrf.mxu0
      %v427 = vadd.f32 %v270, %v426
      %428 = vmatprep.mubr.bf16.mxu0 0
      %429 = vmatmul.mubr.bf16.gmra.mxu0 %v311
      %v430 = vpop.f32.mrf.mxu0
      %v431 = vadd.f32 %v275, %v430
      %v432 = vpop.f32.mrf.mxu0
      %v433 = vadd.f32 %v275, %v432
      %v434 = vpop.f32.mrf.mxu0
      %v435 = vadd.f32 %v280, %v434
      %v436 = vpop.f32.mrf.mxu0
      %v437 = vadd.f32 %v280, %v436
      %438 = vdwg.mxu0
      %439 = vst [vmem:[%s213] sm:$0xff] %v348
      %440 = vst [vmem:[%s213 + $0x8] sm:$0xff] %v350
      %441 = vst [vmem:[%s213 + $0x10] sm:$0xff] %v411
      %442 = vst [vmem:[%s213 + $0x18] sm:$0xff] %v413
      %443 = vst [vmem:[%s213 + $0x20] sm:$0xff] %v352
      %444 = vst [vmem:[%s213 + $0x28] sm:$0xff] %v354
      %445 = vst [vmem:[%s213 + $0x30] sm:$0xff] %v415
      %446 = vst [vmem:[%s213 + $0x38] sm:$0xff] %v417
      %447 = vst [vmem:[%s213 + $0x40] sm:$0xff] %v358
      %448 = vst [vmem:[%s213 + $0x48] sm:$0xff] %v360
      %449 = vst [vmem:[%s213 + $0x50] sm:$0xff] %v421
      %450 = vst [vmem:[%s213 + $0x58] sm:$0xff] %v423
      %451 = vst [vmem:[%s213 + $0x60] sm:$0xff] %v362
      %452 = vst [vmem:[%s213 + $0x68] sm:$0xff] %v364
      %453 = vst [vmem:[%s213 + $0x70] sm:$0xff] %v425
      %454 = vst [vmem:[%s213 + $0x78] sm:$0xff] %v427
      %455 = vst [vmem:[%s213 + $0x80] sm:$0xff] %v368
      %456 = vst [vmem:[%s213 + $0x88] sm:$0xff] %v370
      %457 = vst [vmem:[%s213 + $0x90] sm:$0xff] %v431
      %458 = vst [vmem:[%s213 + $0x98] sm:$0xff] %v433
      %459 = vst [vmem:[%s213 + $0xa0] sm:$0xff] %v372
      %460 = vst [vmem:[%s213 + $0xa8] sm:$0xff] %v374
      %461 = vst [vmem:[%s213 + $0xb0] sm:$0xff] %v435
      %462 = vst [vmem:[%s213 + $0xb8] sm:$0xff] %v437
      %v463 = vld [vmem:[%s202] sm:$0xff]
      %v464 = vld [vmem:[%s202 + $0x8] sm:$0xff]
      %v465 = vld [vmem:[%s202 + $0x10] sm:$0xff]
      %v466 = vld [vmem:[%s202 + $0x18] sm:$0xff]
      %v467 = vld [vmem:[%s202 + $0x20] sm:$0xff]
      %v468 = vld [vmem:[%s202 + $0x28] sm:$0xff]
      %v469 = vld [vmem:[%s202 + $0x30] sm:$0xff]
      %v470 = vld [vmem:[%s202 + $0x38] sm:$0xff]
      %v471 = vld [vmem:[%s202 + $0x40] sm:$0xff]
      %v472 = vld [vmem:[%s202 + $0x48] sm:$0xff]
      %v473 = vld [vmem:[%s202 + $0x50] sm:$0xff]
      %v474 = vld [vmem:[%s202 + $0x58] sm:$0xff]
      %v475 = vld [vmem:[%s202 + $0x60] sm:$0xff]
      %v476 = vld [vmem:[%s202 + $0x68] sm:$0xff]
      %v477 = vld [vmem:[%s202 + $0x70] sm:$0xff]
      %v478 = vld [vmem:[%s202 + $0x78] sm:$0xff]
      %v479 = vpack.c.bf16 %v467, %v463
      %v480 = vpack.c.bf16 %v468, %v464
      %v481 = vpack.c.bf16 %v469, %v465
      %v482 = vpack.c.bf16 %v470, %v466
      %v483 = vpack.c.bf16 %v475, %v471
      %v484 = vpack.c.bf16 %v476, %v472
      %v485 = vpack.c.bf16 %v477, %v473
      %v486 = vpack.c.bf16 %v478, %v474
      %v487 = vld [vmem:[%s1] sm:$0xf]
      %v488 = vld [vmem:[%s1 + $0x4] sm:$0xf]
      %v489 = vld [vmem:[%s1 + $0x8] sm:$0xf]
      %v490 = vld [vmem:[%s1 + $0xc] sm:$0xf]
      %v491 = vld [vmem:[%s1 + $0x10] sm:$0xf]
      %v492 = vld [vmem:[%s1 + $0x14] sm:$0xf]
      %v499 = vunpack.c.l.b16 %v487
      %v500 = vunpack.c.l.b16 %v488
      %v501 = vunpack.c.l.b16 %v489
      %v502 = vunpack.c.l.b16 %v490
      %v503 = vunpack.c.l.b16 %v491
      %v504 = vunpack.c.l.b16 %v492
      %v505 = vpack.c.b16 %v500, %v499
      %v506 = vpack.c.b16 %v502, %v501
      %v507 = vpack.c.b16 %v504, %v503
      %v509 = vsel %vm303, %v505, 0
      %v512 = vsel %vm303, %v506, 0
      %v515 = vsel %vm303, %v507, 0
      %517 = vmatprep.subr.bf16.mxu0 0
      %518 = vmatpush1.bf16.msra.mxu0 0
      %519 = vmatprep.subr.bf16.mxu0 0
      %520 = vmatpush1.bf16.msra.mxu0 0
      %521 = vmatprep.subr.bf16.mxu0 0
      %522 = vmatpush1.bf16.msra.mxu0 0
      %523 = vmatprep.subr.bf16.mxu0 0
      %524 = vmatpush1.bf16.msra.mxu0 0
      %525 = vmatprep.subr.bf16.mxu0 0
      %526 = vmatpush1.bf16.msra.mxu0 0
      %527 = vmatprep.subr.bf16.mxu0 0
      %528 = vmatpush1.bf16.msra.mxu0 0
      %529 = vmatprep.subr.bf16.mxu0 %v484
      %530 = vmatpush1.bf16.msra.mxu0 %v483
      %531 = vmatprep.subr.bf16.mxu0 %v480
      %532 = vmatpush1.bf16.msra.mxu0 %v479
      %533 = vmatprep.subr.bf16.mxu0 0
      %534 = vmatpush2.bf16.msra.mxu0 0
      %535 = vmatprep.subr.bf16.mxu0 0
      %536 = vmatpush2.bf16.msra.mxu0 0
      %537 = vmatprep.subr.bf16.mxu0 0
      %538 = vmatpush2.bf16.msra.mxu0 0
      %539 = vmatprep.subr.bf16.mxu0 0
      %540 = vmatpush2.bf16.msra.mxu0 0
      %541 = vmatprep.subr.bf16.mxu0 0
      %542 = vmatpush2.bf16.msra.mxu0 0
      %543 = vmatprep.subr.bf16.mxu0 0
      %544 = vmatpush2.bf16.msra.mxu0 0
      %545 = vmatprep.subr.bf16.mxu0 0
      %546 = vmatpush2.bf16.msra.mxu0 0
      %547 = vmatprep.subr.bf16.mxu0 0
      %548 = vmatpush2.bf16.msra.mxu0 0
      %549 = vmatprep.mubr.bf16.mxu0 0
      %550 = vmatmul.mubr.bf16.gmra.mxu0 %v509
      %v551 = vpop.f32.mrf.mxu0
      %v552 = vadd.f32 %v255, %v551
      %v553 = vpop.f32.mrf.mxu0
      %v554 = vadd.f32 %v255, %v553
      %v555 = vpop.f32.mrf.mxu0
      %v556 = vadd.f32 %v260, %v555
      %v557 = vpop.f32.mrf.mxu0
      %v558 = vadd.f32 %v260, %v557
      %559 = vmatprep.mubr.bf16.mxu0 0
      %560 = vmatmul.mubr.bf16.gmra.mxu0 %v512
      %v561 = vpop.f32.mrf.mxu0
      %v562 = vadd.f32 %v265, %v561
      %v563 = vpop.f32.mrf.mxu0
      %v564 = vadd.f32 %v265, %v563
      %v565 = vpop.f32.mrf.mxu0
      %v566 = vadd.f32 %v270, %v565
      %v567 = vpop.f32.mrf.mxu0
      %v568 = vadd.f32 %v270, %v567
      %569 = vmatprep.mubr.bf16.mxu0 0
      %570 = vmatmul.mubr.bf16.gmra.mxu0 %v515
      %v571 = vpop.f32.mrf.mxu0
      %v572 = vadd.f32 %v275, %v571
      %v573 = vpop.f32.mrf.mxu0
      %v574 = vadd.f32 %v275, %v573
      %v575 = vpop.f32.mrf.mxu0
      %v576 = vadd.f32 %v280, %v575
      %v577 = vpop.f32.mrf.mxu0
      %v578 = vadd.f32 %v280, %v577
      %579 = vdwg.mxu0
      %580 = vmatprep.subr.bf16.mxu0 0
      %581 = vmatpush1.bf16.msra.mxu0 0
      %582 = vmatprep.subr.bf16.mxu0 0
      %583 = vmatpush1.bf16.msra.mxu0 0
      %584 = vmatprep.subr.bf16.mxu0 0
      %585 = vmatpush1.bf16.msra.mxu0 0
      %586 = vmatprep.subr.bf16.mxu0 0
      %587 = vmatpush1.bf16.msra.mxu0 0
      %588 = vmatprep.subr.bf16.mxu0 0
      %589 = vmatpush1.bf16.msra.mxu0 0
      %590 = vmatprep.subr.bf16.mxu0 0
      %591 = vmatpush1.bf16.msra.mxu0 0
      %592 = vmatprep.subr.bf16.mxu0 %v486
      %593 = vmatpush1.bf16.msra.mxu0 %v485
      %594 = vmatprep.subr.bf16.mxu0 %v482
      %595 = vmatpush1.bf16.msra.mxu0 %v481
      %596 = vmatprep.subr.bf16.mxu0 0
      %597 = vmatpush2.bf16.msra.mxu0 0
      %598 = vmatprep.subr.bf16.mxu0 0
      %599 = vmatpush2.bf16.msra.mxu0 0
      %600 = vmatprep.subr.bf16.mxu0 0
      %601 = vmatpush2.bf16.msra.mxu0 0
      %602 = vmatprep.subr.bf16.mxu0 0
      %603 = vmatpush2.bf16.msra.mxu0 0
      %604 = vmatprep.subr.bf16.mxu0 0
      %605 = vmatpush2.bf16.msra.mxu0 0
      %606 = vmatprep.subr.bf16.mxu0 0
      %607 = vmatpush2.bf16.msra.mxu0 0
      %608 = vmatprep.subr.bf16.mxu0 0
      %609 = vmatpush2.bf16.msra.mxu0 0
      %610 = vmatprep.subr.bf16.mxu0 0
      %611 = vmatpush2.bf16.msra.mxu0 0
      %612 = vmatprep.mubr.bf16.mxu0 0
      %613 = vmatmul.mubr.bf16.gmra.mxu0 %v509
      %v614 = vpop.f32.mrf.mxu0
      %v615 = vadd.f32 %v255, %v614
      %v616 = vpop.f32.mrf.mxu0
      %v617 = vadd.f32 %v255, %v616
      %v618 = vpop.f32.mrf.mxu0
      %v619 = vadd.f32 %v260, %v618
      %v620 = vpop.f32.mrf.mxu0
      %v621 = vadd.f32 %v260, %v620
      %622 = vmatprep.mubr.bf16.mxu0 0
      %623 = vmatmul.mubr.bf16.gmra.mxu0 %v512
      %v624 = vpop.f32.mrf.mxu0
      %v625 = vadd.f32 %v265, %v624
      %v626 = vpop.f32.mrf.mxu0
      %v627 = vadd.f32 %v265, %v626
      %v628 = vpop.f32.mrf.mxu0
      %v629 = vadd.f32 %v270, %v628
      %v630 = vpop.f32.mrf.mxu0
      %v631 = vadd.f32 %v270, %v630
      %632 = vmatprep.mubr.bf16.mxu0 0
      %633 = vmatmul.mubr.bf16.gmra.mxu0 %v515
      %v634 = vpop.f32.mrf.mxu0
      %v635 = vadd.f32 %v275, %v634
      %v636 = vpop.f32.mrf.mxu0
      %v637 = vadd.f32 %v275, %v636
      %v638 = vpop.f32.mrf.mxu0
      %v639 = vadd.f32 %v280, %v638
      %v640 = vpop.f32.mrf.mxu0
      %v641 = vadd.f32 %v280, %v640
      %642 = vdwg.mxu0
      %s643 = scalar_lea.vmem %s213, 192
      %644 = vst [vmem:[%s643] sm:$0xff] %v552
      %645 = vst [vmem:[%s643 + $0x8] sm:$0xff] %v554
      %646 = vst [vmem:[%s643 + $0x10] sm:$0xff] %v615
      %647 = vst [vmem:[%s643 + $0x18] sm:$0xff] %v617
      %648 = vst [vmem:[%s643 + $0x20] sm:$0xff] %v556
      %649 = vst [vmem:[%s643 + $0x28] sm:$0xff] %v558
      %650 = vst [vmem:[%s643 + $0x30] sm:$0xff] %v619
      %651 = vst [vmem:[%s643 + $0x38] sm:$0xff] %v621
      %652 = vst [vmem:[%s643 + $0x40] sm:$0xff] %v562
      %653 = vst [vmem:[%s643 + $0x48] sm:$0xff] %v564
      %654 = vst [vmem:[%s643 + $0x50] sm:$0xff] %v625
      %655 = vst [vmem:[%s643 + $0x58] sm:$0xff] %v627
      %656 = vst [vmem:[%s643 + $0x60] sm:$0xff] %v566
      %657 = vst [vmem:[%s643 + $0x68] sm:$0xff] %v568
      %658 = vst [vmem:[%s643 + $0x70] sm:$0xff] %v629
      %659 = vst [vmem:[%s643 + $0x78] sm:$0xff] %v631
      %660 = vst [vmem:[%s643 + $0x80] sm:$0xff] %v572
      %661 = vst [vmem:[%s643 + $0x88] sm:$0xff] %v574
      %662 = vst [vmem:[%s643 + $0x90] sm:$0xff] %v635
      %663 = vst [vmem:[%s643 + $0x98] sm:$0xff] %v637
      %664 = vst [vmem:[%s643 + $0xa0] sm:$0xff] %v576
      %665 = vst [vmem:[%s643 + $0xa8] sm:$0xff] %v578
      %666 = vst [vmem:[%s643 + $0xb0] sm:$0xff] %v639
      %667 = vst [vmem:[%s643 + $0xb8] sm:$0xff] %v641
      %s668 = smul.u32 2, %s19
      %p669 = scmp.lt.s32.totalorder %s18, 1
      %s670 = scalar_select %p669, %s18, 1
      %p671 = scmp.lt.s32.totalorder %s668, 3
      %s672 = scalar_select %p671, %s668, 3
      %s673 = smul.addr %s672, 24
      %s674 = smul.addr %s670, 96
      %s675 = sadd.s32 %s673, %s674
      %s676 = smul.addr %s675, 8
      %s677 = scalar_lea.vmem %s3, %s676
      // Predicated region
      $region33: #{tlg_attention.3} parent=31 // pred_check
        %p678 = pneg %p116
      $region34: #{tlg_attention.3} parent=31 // pred_check_branch
        %680 = sbr.rel (%p678) target = $region36
      $region35: #{tlg_attention.3} parent=31 // pred_region
        %s681 = smul.u32 2, %s19
      $region36: #{tlg_attention.3} parent=31 // pred_fallthru
        _
    $region32: #{tlg_attention.3} parent=5 // pred_fallthru
      _
    %p682 = scmp.le.s32.totalorder 2, %s9
    // Predicated region
    $region37: #{tlg_attention.3} parent=5 // pred_check
      %p683 = pneg %p682
    $region38: #{tlg_attention.3} parent=5 // pred_check_branch
      %685 = sbr.rel (%p683) target = $region40
    $region39: #{tlg_attention.3} parent=5 // pred_region
      %s686 = ssub.s32 %s9, 2
      // Predicated region
      $region41: #{tlg_attention.3} parent=39 // pred_check
        %p687 = pneg %p122
      $region42: #{tlg_attention.3} parent=39 // pred_check_branch
        %689 = sbr.rel (%p687) target = $region44
      $region43: #{tlg_attention.3} parent=39 // pred_region
        %s690 = smul.u32 2, %s21
        %p691 = scmp.lt.s32.totalorder %s20, 1
        %s692 = scalar_select %p691, %s20, 1
        %p693 = scmp.lt.s32.totalorder %s690, 3
        %s694 = scalar_select %p693, %s690, 3
        %s695 = smul.addr %s694, 24
        %s696 = smul.addr %s692, 96
        %s697 = sadd.s32 %s695, %s696
        %s698 = smul.addr %s697, 8
        %s699 = scalar_lea.vmem %s3, %s698
      $region44: #{tlg_attention.3} parent=39 // pred_fallthru
        _
    $region40: #{tlg_attention.3} parent=5 // pred_fallthru
      _
  $region6: #{tlg_attention.3} parent=0 // loop_footer
    %s13 = sadd.s32 1, %s9
  $region7: #{tlg_attention.3} parent=0 // loop_footer_branch
    %8 = sbr.rel target = $region3
  $region8: #{tlg_attention.3} parent=0 // loop_exit
    _

// kernel: tlg_attention.4
$region0: #{tlg_attention.4}
  #allocation0 [shape = 'u32[]', space=smem, size = 0x4, offset = 0x4, fixed_abs, tag = 'smem constant byte address 0x4 - core index']
  #allocation1 [shape = 'u32[144,128]{1,0:T(1,128)}', space=vmem, size = 0x12000, scoped, tag = 'internal scratch']
  %s0 = inlined_call_operand.vmem [shape: f32[3,2,8,4096], index: 0, kind: input, shape index: {}, may-alias: {0,1,2}]
  %s1 = inlined_call_operand.vmem [shape: f32[3,2,8,4096], index: 1, kind: input, shape index: {}, may-alias: {0,1,2}]
  %s2 = inlined_call_operand.vmem [shape: f32[3,2,8,4096], index: 2, kind: input, shape index: {}, may-alias: {0,1,2}]
  %s3 = inlined_call_operand.vmem [shape: f32[2,8,4096], index: 3, kind: output, shape index: {}]
  %s4 = sld [smem:[#allocation0]]
  $region133: #{tlg_attention.4} parent=0
    _
  %s6 = ssub.s32 1, %s4
  %s7 = scalar_select 0, %s6, %s4
  $region1: #{tlg_attention.4} parent=0
    #allocation2 [shape = 'u8[32768]{0}', space=vmem, size = 0x8000, scoped, tag = 'input window, operand 0']
    #allocation3 [shape = 'u8[32768]{0}', space=vmem, size = 0x8000, scoped, tag = 'input window, operand 1']
    #allocation4 [shape = 'u8[32768]{0}', space=vmem, size = 0x8000, scoped, tag = 'input window, operand 2']
    #allocation5 [shape = 'u8[32768]{0}', space=vmem, size = 0x8000, scoped, tag = 'output window, operand 0']
    loop: start=0, step=1, limit=18
    $region2: #{tlg_attention.4} parent=1 // loop_pre_header
      _
    $region3: #{tlg_attention.4} parent=1 // loop_header
      %s9 = sphi 0, %s13
      %p10 = scmp.ge.s32.totalorder %s9, 18
      %s19 = sphi 0, %s21
      %s22 = sphi 0, %s19
      %s23 = sphi 0, %s22
      %s39 = sphi 0, %s23
      %s71 = sphi 0, %s73
      %s74 = sphi 0, %s71
      %s75 = sphi 0, %s74
      %s91 = sphi 0, %s75
      %s123 = sphi 0, %s125
      %s126 = sphi 0, %s123
      %s127 = sphi 0, %s126
      %s143 = sphi 0, %s127
      %s149 = sphi 0, %s151
      %s152 = sphi 0, %s149
      %s153 = sphi 0, %s152
      %s169 = sphi 0, %s153
    $region4: #{tlg_attention.4} parent=1 // loop_header_branch
      %12 = sbr.rel (%p10) target = $region8
    $region5: #{tlg_attention.4} parent=1 // loop_body
      %s14 = ssub.s32 %s9, 1
      %s15 = ssub.s32 %s9, 2
      %s16 = sadd.s32 %s9, 1
      %s17 = ssub.s32 %s9, %s16
      %p18 = scmp.eq.s32.totalorder %s17, 0
      %s20 = sadd.s32 %s19, 1
      %s21 = scalar_select %p18, %s19, %s20
      %p24 = pneg %p18
      %p25 = scmp.eq.s32.totalorder %s9, 15
      %p26 = por %p24, %p25
      %p27 = scmp.ne.s32.totalorder %s19, %s22
      %p28 = scmp.eq.s32.totalorder %s9, 0
      %p29 = por %p27, %p28
      %p30 = scmp.ne.s32.totalorder %s19, %s22
      %p31 = scmp.eq.s32.totalorder %s14, 15
      %p32 = por %p30, %p31
      %p33 = scmp.ne.s32.totalorder %s22, %s23
      %p34 = scmp.eq.s32.totalorder %s14, 0
      %p35 = por %p33, %p34
      %p36 = scmp.ne.s32.totalorder %s22, %s23
      %p37 = scmp.eq.s32.totalorder %s15, 15
      %p38 = por %p36, %p37
      %p40 = scmp.ne.s32.totalorder %s23, %s39
      %p41 = scmp.eq.s32.totalorder %s15, 0
      %p42 = por %p40, %p41
      %s43 = sadd.s32 %s9, 8
      %p44 = scmp.lt.s32.totalorder %s43, 0
      %s45 = ssub.s32 0, %s43
      %s46 = scalar_select %p44, %s45, %s43
      %s47 = sand.u32 %s46, 15
      %s48 = ssub.s32 0, %s47
      %s49 = scalar_select %p44, %s48, %s47
      %p50 = scmp.ne.s32.totalorder %s49, 0
      %p51 = scmp.lt.s32.totalorder %s49, 0
      %p52 = pnand %p51, %p50
      %p53 = pneg %p52
      %s54 = sadd.s32 %s49, 16
      %s55 = scalar_select %p53, %s54, %s49
      %s56 = sadd.s32 %s16, 8
      %p57 = scmp.lt.s32.totalorder %s56, 0
      %s58 = ssub.s32 0, %s56
      %s59 = scalar_select %p57, %s58, %s56
      %s60 = sand.u32 %s59, 15
      %s61 = ssub.s32 0, %s60
      %s62 = scalar_select %p57, %s61, %s60
      %p63 = scmp.ne.s32.totalorder %s62, 0
      %p64 = scmp.lt.s32.totalorder %s62, 0
      %p65 = pnand %p64, %p63
      %p66 = pneg %p65
      %s67 = sadd.s32 %s62, 16
      %s68 = scalar_select %p66, %s67, %s62
      %s69 = ssub.s32 %s55, %s68
      %p70 = scmp.eq.s32.totalorder %s69, 0
      %s72 = sadd.s32 %s71, 1
      %s73 = scalar_select %p70, %s71, %s72
      %p76 = pneg %p70
      %p77 = scmp.eq.s32.totalorder %s9, 15
      %p78 = por %p76, %p77
      %p79 = scmp.ne.s32.totalorder %s71, %s74
      %p80 = scmp.eq.s32.totalorder %s9, 0
      %p81 = por %p79, %p80
      %p82 = scmp.ne.s32.totalorder %s71, %s74
      %p83 = scmp.eq.s32.totalorder %s14, 15
      %p84 = por %p82, %p83
      %p85 = scmp.ne.s32.totalorder %s74, %s75
      %p86 = scmp.eq.s32.totalorder %s14, 0
      %p87 = por %p85, %p86
      %p88 = scmp.ne.s32.totalorder %s74, %s75
      %p89 = scmp.eq.s32.totalorder %s15, 15
      %p90 = por %p88, %p89
      %p92 = scmp.ne.s32.totalorder %s75, %s91
      %p93 = scmp.eq.s32.totalorder %s15, 0
      %p94 = por %p92, %p93
      %s95 = sadd.s32 %s9, 8
      %p96 = scmp.lt.s32.totalorder %s95, 0
      %s97 = ssub.s32 0, %s95
      %s98 = scalar_select %p96, %s97, %s95
      %s99 = sand.u32 %s98, 15
      %s100 = ssub.s32 0, %s99
      %s101 = scalar_select %p96, %s100, %s99
      %p102 = scmp.ne.s32.totalorder %s101, 0
      %p103 = scmp.lt.s32.totalorder %s101, 0
      %p104 = pnand %p103, %p102
      %p105 = pneg %p104
      %s106 = sadd.s32 %s101, 16
      %s107 = scalar_select %p105, %s106, %s101
      %s108 = sadd.s32 %s16, 8
      %p109 = scmp.lt.s32.totalorder %s108, 0
      %s110 = ssub.s32 0, %s108
      %s111 = scalar_select %p109, %s110, %s108
      %s112 = sand.u32 %s111, 15
      %s113 = ssub.s32 0, %s112
      %s114 = scalar_select %p109, %s113, %s112
      %p115 = scmp.ne.s32.totalorder %s114, 0
      %p116 = scmp.lt.s32.totalorder %s114, 0
      %p117 = pnand %p116, %p115
      %p118 = pneg %p117
      %s119 = sadd.s32 %s114, 16
      %s120 = scalar_select %p118, %s119, %s114
      %s121 = ssub.s32 %s107, %s120
      %p122 = scmp.eq.s32.totalorder %s121, 0
      %s124 = sadd.s32 %s123, 1
      %s125 = scalar_select %p122, %s123, %s124
      %p128 = pneg %p122
      %p129 = scmp.eq.s32.totalorder %s9, 15
      %p130 = por %p128, %p129
      %p131 = scmp.ne.s32.totalorder %s123, %s126
      %p132 = scmp.eq.s32.totalorder %s9, 0
      %p133 = por %p131, %p132
      %p134 = scmp.ne.s32.totalorder %s123, %s126
      %p135 = scmp.eq.s32.totalorder %s14, 15
      %p136 = por %p134, %p135
      %p137 = scmp.ne.s32.totalorder %s126, %s127
      %p138 = scmp.eq.s32.totalorder %s14, 0
      %p139 = por %p137, %p138
      %p140 = scmp.ne.s32.totalorder %s126, %s127
      %p141 = scmp.eq.s32.totalorder %s15, 15
      %p142 = por %p140, %p141
      %p144 = scmp.ne.s32.totalorder %s127, %s143
      %p145 = scmp.eq.s32.totalorder %s15, 0
      %p146 = por %p144, %p145
      %s147 = ssub.s32 %s9, %s16
      %p148 = scmp.eq.s32.totalorder %s147, 0
      %s150 = sadd.s32 %s149, 1
      %s151 = scalar_select %p148, %s149, %s150
      %p154 = pneg %p148
      %p155 = scmp.eq.s32.totalorder %s9, 15
      %p156 = por %p154, %p155
      %p157 = scmp.ne.s32.totalorder %s149, %s152
      %p158 = scmp.eq.s32.totalorder %s9, 0
      %p159 = por %p157, %p158
      %p160 = scmp.ne.s32.totalorder %s149, %s152
      %p161 = scmp.eq.s32.totalorder %s14, 15
      %p162 = por %p160, %p161
      %p163 = scmp.ne.s32.totalorder %s152, %s153
      %p164 = scmp.eq.s32.totalorder %s14, 0
      %p165 = por %p163, %p164
      %p166 = scmp.ne.s32.totalorder %s152, %s153
      %p167 = scmp.eq.s32.totalorder %s15, 15
      %p168 = por %p166, %p167
      %p170 = scmp.ne.s32.totalorder %s153, %s169
      %p171 = scmp.eq.s32.totalorder %s15, 0
      %p172 = por %p170, %p171
      %p173 = scmp.le.s32.totalorder 1, %s9
      %p174 = scmp.lt.s32.totalorder %s9, 17
      %p175 = pnand %p173, %p174
      %p176 = pneg %p175
      // Predicated region
      $region9: #{tlg_attention.4} parent=5 // pred_check
        _
      $region10: #{tlg_attention.4} parent=5 // pred_check_branch
        %178 = sbr.rel (%p175) target = $region12
      $region11: #{tlg_attention.4} parent=5 // pred_region
        %s179 = ssub.s32 %s9, 1
      $region12: #{tlg_attention.4} parent=5 // pred_fallthru
        _
      %p180 = scmp.lt.s32.totalorder %s9, 16
      // Predicated region
      $region13: #{tlg_attention.4} parent=5 // pred_check
        %p181 = pneg %p180
      $region14: #{tlg_attention.4} parent=5 // pred_check_branch
        %183 = sbr.rel (%p181) target = $region16
      $region15: #{tlg_attention.4} parent=5 // pred_region
        // Predicated region
        $region17: #{tlg_attention.4} parent=15 // pred_check
          %p184 = pneg %p29
        $region18: #{tlg_attention.4} parent=15 // pred_check_branch
          %186 = sbr.rel (%p184) target = $region20
        $region19: #{tlg_attention.4} parent=15 // pred_region
          %s187 = sand.u32 %s19, 1
          %s188 = sand.u32 %s19, 1
          %s189 = smul.addr %s188, 32
          %s190 = scalar_lea.vmem [#allocation2], %s189
          %s191 = smul.u32 2, %s9
          %s192 = smul.addr %s191, 8
          %s193 = scalar_lea.vmem %s0, %s192
          // Predicated region
          $region21: #{tlg_attention.4} parent=19 // pred_check
            _
          $region22: #{tlg_attention.4} parent=19 // pred_check_branch
            %195 = sbr.rel (0) target = $region24
          $region23: #{tlg_attention.4} parent=19 // pred_region
            // Predicated region
            $region25: #{tlg_attention.4} parent=23 // pred_check
              _
            $region26: #{tlg_attention.4} parent=23 // pred_check_branch
              %197 = sbr.rel (0) target = $region28
            $region27: #{tlg_attention.4} parent=23 // pred_region
              loop: start=0, step=1, limit=1
              $region29: #{tlg_attention.4} parent=27 // loop_pre_header
                _
              $region30: #{tlg_attention.4} parent=27 // loop_header
                %s199 = sphi 0, %s203
                %p200 = scmp.ge.s32.totalorder %s199, 1
                %s204 = sphi %s193, %s193
                %s205 = sphi %s190, %s190
              $region31: #{tlg_attention.4} parent=27 // loop_header_branch
                %202 = sbr.rel (%p200) target = $region35
              $region32: #{tlg_attention.4} parent=27 // loop_body
                %v206 = vld [vmem:[%s204] sm:$0xff]
                %207 = vst [vmem:[%s205] sm:$0xff] %v206
                %v208 = vld [vmem:[%s204 + $0x8] sm:$0xff]
                %209 = vst [vmem:[%s205 + $0x8] sm:$0xff] %v208
                %v210 = vld [vmem:[%s204 + $0x100] sm:$0xff]
                %211 = vst [vmem:[%s205 + $0x10] sm:$0xff] %v210
                %v212 = vld [vmem:[%s204 + $0x108] sm:$0xff]
                %213 = vst [vmem:[%s205 + $0x18] sm:$0xff] %v212
              $region33: #{tlg_attention.4} parent=27 // loop_footer
                %s203 = sadd.s32 1, %s199
              $region34: #{tlg_attention.4} parent=27 // loop_footer_branch
                %198 = sbr.rel target = $region30
              $region35: #{tlg_attention.4} parent=27 // loop_exit
                _
            $region28: #{tlg_attention.4} parent=23 // pred_fallthru
              _
            // Predicated region
            $region36: #{tlg_attention.4} parent=23 // pred_check
              _
            $region37: #{tlg_attention.4} parent=23 // pred_check_branch
              %215 = sbr.rel target = $region39
            $region38: #{tlg_attention.4} parent=23 // pred_region
              _
            $region39: #{tlg_attention.4} parent=23 // pred_fallthru
              _
          $region24: #{tlg_attention.4} parent=19 // pred_fallthru
            _
          %216 = vnop
        $region20: #{tlg_attention.4} parent=15 // pred_fallthru
          _
        // Predicated region
        $region40: #{tlg_attention.4} parent=15 // pred_check
          %p217 = pneg %p81
        $region41: #{tlg_attention.4} parent=15 // pred_check_branch
          %219 = sbr.rel (%p217) target = $region43
        $region42: #{tlg_attention.4} parent=15 // pred_region
          %s220 = sand.u32 %s71, 1
          %s221 = sand.u32 %s71, 1
          %s222 = smul.addr %s221, 32
          %s223 = scalar_lea.vmem [#allocation3], %s222
          %s224 = sadd.s32 %s9, 8
          %p225 = scmp.lt.s32.totalorder %s224, 0
          %s226 = ssub.s32 0, %s224
          %s227 = scalar_select %p225, %s226, %s224
          %s228 = sand.u32 %s227, 15
          %s229 = ssub.s32 0, %s228
          %s230 = scalar_select %p225, %s229, %s228
          %p231 = scmp.ne.s32.totalorder %s230, 0
          %p232 = scmp.lt.s32.totalorder %s230, 0
          %p233 = pnand %p232, %p231
          %p234 = pneg %p233
          %s235 = sadd.s32 %s230, 16
          %s236 = scalar_select %p234, %s235, %s230
          %s237 = smul.u32 2, %s236
          %s238 = sadd.s32 %s237, 64
          %s239 = smul.addr %s238, 8
          %s240 = scalar_lea.vmem %s1, %s239
          // Predicated region
          $region44: #{tlg_attention.4} parent=42 // pred_check
            _
          $region45: #{tlg_attention.4} parent=42 // pred_check_branch
            %242 = sbr.rel (0) target = $region47
          $region46: #{tlg_attention.4} parent=42 // pred_region
            // Predicated region
            $region48: #{tlg_attention.4} parent=46 // pred_check
              _
            $region49: #{tlg_attention.4} parent=46 // pred_check_branch
              %244 = sbr.rel (0) target = $region51
            $region50: #{tlg_attention.4} parent=46 // pred_region
              loop: start=0, step=1, limit=1
              $region52: #{tlg_attention.4} parent=50 // loop_pre_header
                _
              $region53: #{tlg_attention.4} parent=50 // loop_header
                %s246 = sphi 0, %s250
                %p247 = scmp.ge.s32.totalorder %s246, 1
                %s251 = sphi %s240, %s240
                %s252 = sphi %s223, %s223
              $region54: #{tlg_attention.4} parent=50 // loop_header_branch
                %249 = sbr.rel (%p247) target = $region58
              $region55: #{tlg_attention.4} parent=50 // loop_body
                %v253 = vld [vmem:[%s251] sm:$0xff]
                %254 = vst [vmem:[%s252] sm:$0xff] %v253
                %v255 = vld [vmem:[%s251 + $0x8] sm:$0xff]
                %256 = vst [vmem:[%s252 + $0x8] sm:$0xff] %v255
                %v257 = vld [vmem:[%s251 + $0x100] sm:$0xff]
                %258 = vst [vmem:[%s252 + $0x10] sm:$0xff] %v257
                %v259 = vld [vmem:[%s251 + $0x108] sm:$0xff]
                %260 = vst [vmem:[%s252 + $0x18] sm:$0xff] %v259
              $region56: #{tlg_attention.4} parent=50 // loop_footer
                %s250 = sadd.s32 1, %s246
              $region57: #{tlg_attention.4} parent=50 // loop_footer_branch
                %245 = sbr.rel target = $region53
              $region58: #{tlg_attention.4} parent=50 // loop_exit
                _
            $region51: #{tlg_attention.4} parent=46 // pred_fallthru
              _
            // Predicated region
            $region59: #{tlg_attention.4} parent=46 // pred_check
              _
            $region60: #{tlg_attention.4} parent=46 // pred_check_branch
              %262 = sbr.rel target = $region62
            $region61: #{tlg_attention.4} parent=46 // pred_region
              _
            $region62: #{tlg_attention.4} parent=46 // pred_fallthru
              _
          $region47: #{tlg_attention.4} parent=42 // pred_fallthru
            _
          %263 = vnop
        $region43: #{tlg_attention.4} parent=15 // pred_fallthru
          _
        // Predicated region
        $region63: #{tlg_attention.4} parent=15 // pred_check
          %p264 = pneg %p133
        $region64: #{tlg_attention.4} parent=15 // pred_check_branch
          %266 = sbr.rel (%p264) target = $region66
        $region65: #{tlg_attention.4} parent=15 // pred_region
          %s267 = sand.u32 %s123, 1
          %s268 = sand.u32 %s123, 1
          %s269 = smul.addr %s268, 32
          %s270 = scalar_lea.vmem [#allocation4], %s269
          %s271 = sadd.s32 %s9, 8
          %p272 = scmp.lt.s32.totalorder %s271, 0
          %s273 = ssub.s32 0, %s271
          %s274 = scalar_select %p272, %s273, %s271
          %s275 = sand.u32 %s274, 15
          %s276 = ssub.s32 0, %s275
          %s277 = scalar_select %p272, %s276, %s275
          %p278 = scmp.ne.s32.totalorder %s277, 0
          %p279 = scmp.lt.s32.totalorder %s277, 0
          %p280 = pnand %p279, %p278
          %p281 = pneg %p280
          %s282 = sadd.s32 %s277, 16
          %s283 = scalar_select %p281, %s282, %s277
          %s284 = smul.u32 2, %s283
          %s285 = sadd.s32 %s284, 128
          %s286 = smul.addr %s285, 8
          %s287 = scalar_lea.vmem %s2, %s286
          // Predicated region
          $region67: #{tlg_attention.4} parent=65 // pred_check
            _
          $region68: #{tlg_attention.4} parent=65 // pred_check_branch
            %289 = sbr.rel (0) target = $region70
          $region69: #{tlg_attention.4} parent=65 // pred_region
            // Predicated region
            $region71: #{tlg_attention.4} parent=69 // pred_check
              _
            $region72: #{tlg_attention.4} parent=69 // pred_check_branch
              %291 = sbr.rel (0) target = $region74
            $region73: #{tlg_attention.4} parent=69 // pred_region
              loop: start=0, step=1, limit=1
              $region75: #{tlg_attention.4} parent=73 // loop_pre_header
                _
              $region76: #{tlg_attention.4} parent=73 // loop_header
                %s293 = sphi 0, %s297
                %p294 = scmp.ge.s32.totalorder %s293, 1
                %s298 = sphi %s287, %s287
                %s299 = sphi %s270, %s270
              $region77: #{tlg_attention.4} parent=73 // loop_header_branch
                %296 = sbr.rel (%p294) target = $region81
              $region78: #{tlg_attention.4} parent=73 // loop_body
                %v300 = vld [vmem:[%s298] sm:$0xff]
                %301 = vst [vmem:[%s299] sm:$0xff] %v300
                %v302 = vld [vmem:[%s298 + $0x8] sm:$0xff]
                %303 = vst [vmem:[%s299 + $0x8] sm:$0xff] %v302
                %v304 = vld [vmem:[%s298 + $0x100] sm:$0xff]
                %305 = vst [vmem:[%s299 + $0x10] sm:$0xff] %v304
                %v306 = vld [vmem:[%s298 + $0x108] sm:$0xff]
                %307 = vst [vmem:[%s299 + $0x18] sm:$0xff] %v306
              $region79: #{tlg_attention.4} parent=73 // loop_footer
                %s297 = sadd.s32 1, %s293
              $region80: #{tlg_attention.4} parent=73 // loop_footer_branch
                %292 = sbr.rel target = $region76
              $region81: #{tlg_attention.4} parent=73 // loop_exit
                _
            $region74: #{tlg_attention.4} parent=69 // pred_fallthru
              _
            // Predicated region
            $region82: #{tlg_attention.4} parent=69 // pred_check
              _
            $region83: #{tlg_attention.4} parent=69 // pred_check_branch
              %309 = sbr.rel target = $region85
            $region84: #{tlg_attention.4} parent=69 // pred_region
              _
            $region85: #{tlg_attention.4} parent=69 // pred_fallthru
              _
          $region70: #{tlg_attention.4} parent=65 // pred_fallthru
            _
          %310 = vnop
        $region66: #{tlg_attention.4} parent=15 // pred_fallthru
          _
      $region16: #{tlg_attention.4} parent=5 // pred_fallthru
        _
      %p311 = scmp.le.s32.totalorder 1, %s9
      %p312 = scmp.lt.s32.totalorder %s9, 17
      %p313 = pnand %p311, %p312
      %p314 = pneg %p313
      // Predicated region
      $region86: #{tlg_attention.4} parent=5 // pred_check
        _
      $region87: #{tlg_attention.4} parent=5 // pred_check_branch
        %316 = sbr.rel (%p313) target = $region89
      $region88: #{tlg_attention.4} parent=5 // pred_region
        %s317 = ssub.s32 %s9, 1
        %s318 = sand.u32 %s22, 1
        %s319 = sand.u32 %s22, 1
        %s320 = smul.addr %s319, 32
        %s321 = scalar_lea.vmem [#allocation2], %s320
        // Predicated region
        $region90: #{tlg_attention.4} parent=88 // pred_check
          %p322 = pneg %p35
        $region91: #{tlg_attention.4} parent=88 // pred_check_branch
          %324 = sbr.rel (%p322) target = $region93
        $region92: #{tlg_attention.4} parent=88 // pred_region
          _
        $region93: #{tlg_attention.4} parent=88 // pred_fallthru
          _
        %s325 = sand.u32 %s74, 1
        %s326 = sand.u32 %s74, 1
        %s327 = smul.addr %s326, 32
        %s328 = scalar_lea.vmem [#allocation3], %s327
        // Predicated region
        $region94: #{tlg_attention.4} parent=88 // pred_check
          %p329 = pneg %p87
        $region95: #{tlg_attention.4} parent=88 // pred_check_branch
          %331 = sbr.rel (%p329) target = $region97
        $region96: #{tlg_attention.4} parent=88 // pred_region
          _
        $region97: #{tlg_attention.4} parent=88 // pred_fallthru
          _
        %s332 = sand.u32 %s126, 1
        %s333 = sand.u32 %s126, 1
        %s334 = smul.addr %s333, 32
        %s335 = scalar_lea.vmem [#allocation4], %s334
        // Predicated region
        $region98: #{tlg_attention.4} parent=88 // pred_check
          %p336 = pneg %p139
        $region99: #{tlg_attention.4} parent=88 // pred_check_branch
          %338 = sbr.rel (%p336) target = $region101
        $region100: #{tlg_attention.4} parent=88 // pred_region
          _
        $region101: #{tlg_attention.4} parent=88 // pred_fallthru
          _
        %s339 = sand.u32 %s22, 1
        %s340 = sand.u32 %s22, 1
        %s341 = smul.addr %s340, 32
        %s342 = scalar_lea.vmem [#allocation2], %s341
        %p343 = pneg %p35
        %p344 = pneg %p32
        %s345 = sand.u32 %s74, 1
        %s346 = sand.u32 %s74, 1
        %s347 = smul.addr %s346, 32
        %s348 = scalar_lea.vmem [#allocation3], %s347
        %p349 = pneg %p87
        %p350 = pneg %p84
        %s351 = sand.u32 %s126, 1
        %s352 = sand.u32 %s126, 1
        %s353 = smul.addr %s352, 32
        %s354 = scalar_lea.vmem [#allocation4], %s353
        %p355 = pneg %p139
        %p356 = pneg %p136
        %p357 = pneg %p165
        %p358 = pneg %p162
        %s359 = sand.u32 %s152, 1
        %s360 = sand.u32 %s152, 1
        %s361 = smul.addr %s360, 32
        %s362 = scalar_lea.vmem [#allocation5], %s361
        %s363 = smul.u32 2, %s14
        %s364 = sadd.s32 %s14, 8
        %p365 = scmp.lt.s32.totalorder %s364, 0
        %s366 = ssub.s32 0, %s364
        %s367 = scalar_select %p365, %s366, %s364
        %s368 = sand.u32 %s367, 15
        %s369 = ssub.s32 0, %s368
        %s370 = scalar_select %p365, %s369, %s368
        %p371 = scmp.ne.s32.totalorder %s370, 0
        %p372 = scmp.lt.s32.totalorder %s370, 0
        %p373 = pnand %p372, %p371
        %p374 = pneg %p373
        %s375 = sadd.s32 %s370, 16
        %s376 = scalar_select %p374, %s375, %s370
        %s377 = smul.u32 2, %s376
        %s378 = sadd.s32 %s14, 8
        %p379 = scmp.lt.s32.totalorder %s378, 0
        %s380 = ssub.s32 0, %s378
        %s381 = scalar_select %p379, %s380, %s378
        %s382 = sand.u32 %s381, 15
        %s383 = ssub.s32 0, %s382
        %s384 = scalar_select %p379, %s383, %s382
        %p385 = scmp.ne.s32.totalorder %s384, 0
        %p386 = scmp.lt.s32.totalorder %s384, 0
        %p387 = pnand %p386, %p385
        %p388 = pneg %p387
        %s389 = sadd.s32 %s384, 16
        %s390 = scalar_select %p388, %s389, %s384
        %s391 = smul.u32 2, %s390
        %s392 = smul.u32 2, %s14
        %v393 = vld [vmem:[%s321] sm:$0xff]
        %v394 = vld [vmem:[%s321 + $0x8] sm:$0xff]
        %v397 = vcombine.low %v393, %v394
        %v398 = vcombine.high %v393, %v394
        %v400 = vunpack.c.l.s4 1966171168
        %v401 = vunpack.c.0.s8 %v400
        %v402 = vlaneseq
        %v403 = vshrl.u32 %v402, 7
        %v404 = vsub.s32 %v401, %v403
        %v405 = vrot.slane %v397, %v404
        %v407 = vunpack.c.l.s4 1966171168
        %v408 = vunpack.c.0.s8 %v407
        %v409 = vlaneseq
        %v410 = vshrl.u32 %v409, 7
        %v411 = vsub.s32 %v408, %v410
        %v412 = vrot.slane %v398, %v411
        %v413 = vcombine.high %v405, %v405
        %v414 = vcombine.high %v412, %v412
        %v416 = vunpack.c.l.s4 1966171168
        %v417 = vunpack.c.0.s8 %v416
        %v418 = vlaneseq
        %v419 = vshrl.u32 %v418, 7
        %v420 = vsub.s32 %v417, %v419
        %v421 = vrot.slane %v405, %v420
        %v423 = vunpack.c.l.s4 1966171168
        %v424 = vunpack.c.0.s8 %v423
        %v425 = vlaneseq
        %v426 = vshrl.u32 %v425, 7
        %v427 = vsub.s32 %v424, %v426
        %v428 = vrot.slane %v412, %v427
        %v430 = vunpack.c.l.s4 1966171168
        %v431 = vunpack.c.0.s8 %v430
        %v432 = vlaneseq
        %v433 = vshrl.u32 %v432, 7
        %v434 = vsub.s32 %v431, %v433
        %v435 = vrot.slane %v413, %v434
        %v437 = vunpack.c.l.s4 1966171168
        %v438 = vunpack.c.0.s8 %v437
        %v439 = vlaneseq
        %v440 = vshrl.u32 %v439, 7
        %v441 = vsub.s32 %v438, %v440
        %v442 = vrot.slane %v414, %v441
        %v443 = vcombine.high %v421, %v421
        %v444 = vcombine.high %v428, %v428
        %v445 = vcombine.high %v435, %v435
        %v446 = vcombine.high %v442, %v442
        %v447 = vld [vmem:[%s328] sm:$0xff]
        %v448 = vld [vmem:[%s328 + $0x8] sm:$0xff]
        %v449 = vlaneseq
        %v450 = vshrl.u32 %v449, 7
        %v451 = vsub.s32 0, %v450
        %v452 = vrot.slane %v421, %v451
        %v453 = vlaneseq
        %v454 = vshrl.u32 %v453, 7
        %v455 = vsub.s32 1, %v454
        %v456 = vrot.slane %v421, %v455
        %v457 = vlaneseq
        %v458 = vshrl.u32 %v457, 7
        %v459 = vsub.s32 0, %v458
        %v460 = vrot.slane %v435, %v459
        %v461 = vlaneseq
        %v462 = vshrl.u32 %v461, 7
        %v463 = vsub.s32 1, %v462
        %v464 = vrot.slane %v435, %v463
        %v465 = vlaneseq
        %v466 = vshrl.u32 %v465, 7
        %v467 = vsub.s32 0, %v466
        %v468 = vrot.slane %v443, %v467
        %v469 = vlaneseq
        %v470 = vshrl.u32 %v469, 7
        %v471 = vsub.s32 1, %v470
        %v472 = vrot.slane %v443, %v471
        %v473 = vlaneseq
        %v474 = vshrl.u32 %v473, 7
        %v475 = vsub.s32 0, %v474
        %v476 = vrot.slane %v445, %v475
        %v477 = vlaneseq
        %v478 = vshrl.u32 %v477, 7
        %v479 = vsub.s32 1, %v478
        %v480 = vrot.slane %v445, %v479
        %v481 = vlaneseq
        %v482 = vshrl.u32 %v481, 7
        %v483 = vsub.s32 0, %v482
        %v484 = vrot.slane %v428, %v483
        %v485 = vlaneseq
        %v486 = vshrl.u32 %v485, 7
        %v487 = vsub.s32 1, %v486
        %v488 = vrot.slane %v428, %v487
        %v489 = vlaneseq
        %v490 = vshrl.u32 %v489, 7
        %v491 = vsub.s32 0, %v490
        %v492 = vrot.slane %v442, %v491
        %v493 = vlaneseq
        %v494 = vshrl.u32 %v493, 7
        %v495 = vsub.s32 1, %v494
        %v496 = vrot.slane %v442, %v495
        %v497 = vlaneseq
        %v498 = vshrl.u32 %v497, 7
        %v499 = vsub.s32 0, %v498
        %v500 = vrot.slane %v444, %v499
        %v501 = vlaneseq
        %v502 = vshrl.u32 %v501, 7
        %v503 = vsub.s32 1, %v502
        %v504 = vrot.slane %v444, %v503
        %v505 = vlaneseq
        %v506 = vshrl.u32 %v505, 7
        %v507 = vsub.s32 0, %v506
        %v508 = vrot.slane %v446, %v507
        %v509 = vlaneseq
        %v510 = vshrl.u32 %v509, 7
        %v511 = vsub.s32 1, %v510
        %v512 = vrot.slane %v446, %v511
        %v529 = vmul.f32 %v452, %v447
        %v530 = vmul.f32 %v456, %v448
        %v531 = vmul.f32 %v460, %v447
        %v532 = vmul.f32 %v464, %v448
        %v533 = vmul.f32 %v468, %v447
        %v534 = vmul.f32 %v472, %v448
        %v535 = vmul.f32 %v476, %v447
        %v536 = vmul.f32 %v480, %v448
        %v537 = vmul.f32 %v484, %v447
        %v538 = vmul.f32 %v488, %v448
        %v539 = vmul.f32 %v492, %v447
        %v540 = vmul.f32 %v496, %v448
        %v541 = vmul.f32 %v500, %v447
        %v542 = vmul.f32 %v504, %v448
        %v543 = vmul.f32 %v508, %v447
        %v544 = vmul.f32 %v512, %v448
        %s545 = scalar_lea.vmem %s321, 16 [#allocation2]
        %v546 = vld [vmem:[%s545] sm:$0xff]
        %v547 = vld [vmem:[%s545 + $0x8] sm:$0xff]
        %v550 = vcombine.low %v546, %v547
        %v551 = vcombine.high %v546, %v547
        %v553 = vunpack.c.l.s4 1966171168
        %v554 = vunpack.c.0.s8 %v553
        %v555 = vlaneseq
        %v556 = vshrl.u32 %v555, 7
        %v557 = vsub.s32 %v554, %v556
        %v558 = vrot.slane %v550, %v557
        %v560 = vunpack.c.l.s4 1966171168
        %v561 = vunpack.c.0.s8 %v560
        %v562 = vlaneseq
        %v563 = vshrl.u32 %v562, 7
        %v564 = vsub.s32 %v561, %v563
        %v565 = vrot.slane %v551, %v564
        %v566 = vcombine.high %v558, %v558
        %v567 = vcombine.high %v565, %v565
        %v569 = vunpack.c.l.s4 1966171168
        %v570 = vunpack.c.0.s8 %v569
        %v571 = vlaneseq
        %v572 = vshrl.u32 %v571, 7
        %v573 = vsub.s32 %v570, %v572
        %v574 = vrot.slane %v558, %v573
        %v576 = vunpack.c.l.s4 1966171168
        %v577 = vunpack.c.0.s8 %v576
        %v578 = vlaneseq
        %v579 = vshrl.u32 %v578, 7
        %v580 = vsub.s32 %v577, %v579
        %v581 = vrot.slane %v565, %v580
        %v583 = vunpack.c.l.s4 1966171168
        %v584 = vunpack.c.0.s8 %v583
        %v585 = vlaneseq
        %v586 = vshrl.u32 %v585, 7
        %v587 = vsub.s32 %v584, %v586
        %v588 = vrot.slane %v566, %v587
        %v590 = vunpack.c.l.s4 1966171168
        %v591 = vunpack.c.0.s8 %v590
        %v592 = vlaneseq
        %v593 = vshrl.u32 %v592, 7
        %v594 = vsub.s32 %v591, %v593
        %v595 = vrot.slane %v567, %v594
        %v596 = vcombine.high %v574, %v574
        %v597 = vcombine.high %v581, %v581
        %v598 = vcombine.high %v588, %v588
        %v599 = vcombine.high %v595, %v595
        %s600 = scalar_lea.vmem %s328, 16 [#allocation3]
        %v601 = vld [vmem:[%s600] sm:$0xff]
        %v602 = vld [vmem:[%s600 + $0x8] sm:$0xff]
        %v603 = vlaneseq
        %v604 = vshrl.u32 %v603, 7
        %v605 = vsub.s32 0, %v604
        %v606 = vrot.slane %v574, %v605
        %v607 = vlaneseq
        %v608 = vshrl.u32 %v607, 7
        %v609 = vsub.s32 1, %v608
        %v610 = vrot.slane %v574, %v609
        %v611 = vlaneseq
        %v612 = vshrl.u32 %v611, 7
        %v613 = vsub.s32 0, %v612
        %v614 = vrot.slane %v588, %v613
        %v615 = vlaneseq
        %v616 = vshrl.u32 %v615, 7
        %v617 = vsub.s32 1, %v616
        %v618 = vrot.slane %v588, %v617
        %v619 = vlaneseq
        %v620 = vshrl.u32 %v619, 7
        %v621 = vsub.s32 0, %v620
        %v622 = vrot.slane %v596, %v621
        %v623 = vlaneseq
        %v624 = vshrl.u32 %v623, 7
        %v625 = vsub.s32 1, %v624
        %v626 = vrot.slane %v596, %v625
        %v627 = vlaneseq
        %v628 = vshrl.u32 %v627, 7
        %v629 = vsub.s32 0, %v628
        %v630 = vrot.slane %v598, %v629
        %v631 = vlaneseq
        %v632 = vshrl.u32 %v631, 7
        %v633 = vsub.s32 1, %v632
        %v634 = vrot.slane %v598, %v633
        %v635 = vlaneseq
        %v636 = vshrl.u32 %v635, 7
        %v637 = vsub.s32 0, %v636
        %v638 = vrot.slane %v581, %v637
        %v639 = vlaneseq
        %v640 = vshrl.u32 %v639, 7
        %v641 = vsub.s32 1, %v640
        %v642 = vrot.slane %v581, %v641
        %v643 = vlaneseq
        %v644 = vshrl.u32 %v643, 7
        %v645 = vsub.s32 0, %v644
        %v646 = vrot.slane %v595, %v645
        %v647 = vlaneseq
        %v648 = vshrl.u32 %v647, 7
        %v649 = vsub.s32 1, %v648
        %v650 = vrot.slane %v595, %v649
        %v651 = vlaneseq
        %v652 = vshrl.u32 %v651, 7
        %v653 = vsub.s32 0, %v652
        %v654 = vrot.slane %v597, %v653
        %v655 = vlaneseq
        %v656 = vshrl.u32 %v655, 7
        %v657 = vsub.s32 1, %v656
        %v658 = vrot.slane %v597, %v657
        %v659 = vlaneseq
        %v660 = vshrl.u32 %v659, 7
        %v661 = vsub.s32 0, %v660
        %v662 = vrot.slane %v599, %v661
        %v663 = vlaneseq
        %v664 = vshrl.u32 %v663, 7
        %v665 = vsub.s32 1, %v664
        %v666 = vrot.slane %v599, %v665
        %v683 = vmul.f32 %v606, %v601
        %v684 = vmul.f32 %v610, %v602
        %v685 = vmul.f32 %v614, %v601
        %v686 = vmul.f32 %v618, %v602
        %v687 = vmul.f32 %v622, %v601
        %v688 = vmul.f32 %v626, %v602
        %v689 = vmul.f32 %v630, %v601
        %v690 = vmul.f32 %v634, %v602
        %v691 = vmul.f32 %v638, %v601
        %v692 = vmul.f32 %v642, %v602
        %v693 = vmul.f32 %v646, %v601
        %v694 = vmul.f32 %v650, %v602
        %v695 = vmul.f32 %v654, %v601
        %v696 = vmul.f32 %v658, %v602
        %v697 = vmul.f32 %v662, %v601
        %v698 = vmul.f32 %v666, %v602
        %v699 = vadd.f32 %v529, %v683
        %v700 = vadd.f32 %v530, %v684
        %v701 = vadd.f32 %v531, %v685
        %v702 = vadd.f32 %v532, %v686
        %v703 = vadd.f32 %v533, %v687
        %v704 = vadd.f32 %v534, %v688
        %v705 = vadd.f32 %v535, %v689
        %v706 = vadd.f32 %v536, %v690
        %v707 = vadd.f32 %v537, %v691
        %v708 = vadd.f32 %v538, %v692
        %v709 = vadd.f32 %v539, %v693
        %v710 = vadd.f32 %v540, %v694
        %v711 = vadd.f32 %v541, %v695
        %v712 = vadd.f32 %v542, %v696
        %v713 = vadd.f32 %v543, %v697
        %v714 = vadd.f32 %v544, %v698
        %v715 = vmul.f32 %v699, 0.70710677
        %v716 = vmul.f32 %v700, 0.70710677
        %v717 = vmul.f32 %v701, 0.70710677
        %v718 = vmul.f32 %v702, 0.70710677
        %v719 = vmul.f32 %v703, 0.70710677
        %v720 = vmul.f32 %v704, 0.70710677
        %v721 = vmul.f32 %v705, 0.70710677
        %v722 = vmul.f32 %v706, 0.70710677
        %v723 = vmul.f32 %v707, 0.70710677
        %v724 = vmul.f32 %v708, 0.70710677
        %v725 = vmul.f32 %v709, 0.70710677
        %v726 = vmul.f32 %v710, 0.70710677
        %v727 = vmul.f32 %v711, 0.70710677
        %v728 = vmul.f32 %v712, 0.70710677
        %v729 = vmul.f32 %v713, 0.70710677
        %v730 = vmul.f32 %v714, 0.70710677
        %v731 = vrot.slane %v715, 4
        %v732 = vmax.f32 %v715, %v731
        %v733 = vrot.slane %v732, 2
        %v734 = vmax.f32 %v732, %v733
        %v735 = vrot.slane %v734, 1
        %v736 = vmax.f32 %v734, %v735
        %v737 = vrot.slane %v716, 4
        %v738 = vmax.f32 %v716, %v737
        %v739 = vrot.slane %v738, 2
        %v740 = vmax.f32 %v738, %v739
        %v741 = vrot.slane %v740, 1
        %v742 = vmax.f32 %v740, %v741
        %v743 = vrot.slane %v717, 4
        %v744 = vmax.f32 %v717, %v743
        %v745 = vrot.slane %v744, 2
        %v746 = vmax.f32 %v744, %v745
        %v747 = vrot.slane %v746, 1
        %v748 = vmax.f32 %v746, %v747
        %v749 = vrot.slane %v718, 4
        %v750 = vmax.f32 %v718, %v749
        %v751 = vrot.slane %v750, 2
        %v752 = vmax.f32 %v750, %v751
        %v753 = vrot.slane %v752, 1
        %v754 = vmax.f32 %v752, %v753
        %v755 = vrot.slane %v719, 4
        %v756 = vmax.f32 %v719, %v755
        %v757 = vrot.slane %v756, 2
        %v758 = vmax.f32 %v756, %v757
        %v759 = vrot.slane %v758, 1
        %v760 = vmax.f32 %v758, %v759
        %v761 = vrot.slane %v720, 4
        %v762 = vmax.f32 %v720, %v761
        %v763 = vrot.slane %v762, 2
        %v764 = vmax.f32 %v762, %v763
        %v765 = vrot.slane %v764, 1
        %v766 = vmax.f32 %v764, %v765
        %v767 = vrot.slane %v721, 4
        %v768 = vmax.f32 %v721, %v767
        %v769 = vrot.slane %v768, 2
        %v770 = vmax.f32 %v768, %v769
        %v771 = vrot.slane %v770, 1
        %v772 = vmax.f32 %v770, %v771
        %v773 = vrot.slane %v722, 4
        %v774 = vmax.f32 %v722, %v773
        %v775 = vrot.slane %v774, 2
        %v776 = vmax.f32 %v774, %v775
        %v777 = vrot.slane %v776, 1
        %v778 = vmax.f32 %v776, %v777
        %v779 = vrot.slane %v723, 4
        %v780 = vmax.f32 %v723, %v779
        %v781 = vrot.slane %v780, 2
        %v782 = vmax.f32 %v780, %v781
        %v783 = vrot.slane %v782, 1
        %v784 = vmax.f32 %v782, %v783
        %v785 = vrot.slane %v724, 4
        %v786 = vmax.f32 %v724, %v785
        %v787 = vrot.slane %v786, 2
        %v788 = vmax.f32 %v786, %v787
        %v789 = vrot.slane %v788, 1
        %v790 = vmax.f32 %v788, %v789
        %v791 = vrot.slane %v725, 4
        %v792 = vmax.f32 %v725, %v791
        %v793 = vrot.slane %v792, 2
        %v794 = vmax.f32 %v792, %v793
        %v795 = vrot.slane %v794, 1
        %v796 = vmax.f32 %v794, %v795
        %v797 = vrot.slane %v726, 4
        %v798 = vmax.f32 %v726, %v797
        %v799 = vrot.slane %v798, 2
        %v800 = vmax.f32 %v798, %v799
        %v801 = vrot.slane %v800, 1
        %v802 = vmax.f32 %v800, %v801
        %v803 = vrot.slane %v727, 4
        %v804 = vmax.f32 %v727, %v803
        %v805 = vrot.slane %v804, 2
        %v806 = vmax.f32 %v804, %v805
        %v807 = vrot.slane %v806, 1
        %v808 = vmax.f32 %v806, %v807
        %v809 = vrot.slane %v728, 4
        %v810 = vmax.f32 %v728, %v809
        %v811 = vrot.slane %v810, 2
        %v812 = vmax.f32 %v810, %v811
        %v813 = vrot.slane %v812, 1
        %v814 = vmax.f32 %v812, %v813
        %v815 = vrot.slane %v729, 4
        %v816 = vmax.f32 %v729, %v815
        %v817 = vrot.slane %v816, 2
        %v818 = vmax.f32 %v816, %v817
        %v819 = vrot.slane %v818, 1
        %v820 = vmax.f32 %v818, %v819
        %v821 = vrot.slane %v730, 4
        %v822 = vmax.f32 %v730, %v821
        %v823 = vrot.slane %v822, 2
        %v824 = vmax.f32 %v822, %v823
        %v825 = vrot.slane %v824, 1
        %v826 = vmax.f32 %v824, %v825
        %v827 = vsub.f32 %v715, %v736
        %v828 = vsub.f32 %v716, %v742
        %v829 = vsub.f32 %v717, %v748
        %v830 = vsub.f32 %v718, %v754
        %v831 = vsub.f32 %v719, %v760
        %v832 = vsub.f32 %v720, %v766
        %v833 = vsub.f32 %v721, %v772
        %v834 = vsub.f32 %v722, %v778
        %v835 = vsub.f32 %v723, %v784
        %v836 = vsub.f32 %v724, %v790
        %v837 = vsub.f32 %v725, %v796
        %v838 = vsub.f32 %v726, %v802
        %v839 = vsub.f32 %v727, %v808
        %v840 = vsub.f32 %v728, %v814
        %v841 = vsub.f32 %v729, %v820
        %v842 = vsub.f32 %v730, %v826
        %v843 = vmul.f32 %v827, 1.442695
        %v844 = vpow.pop %v843
        %v845 = vmul.f32 %v828, 1.442695
        %v846 = vpow.pop %v845
        %v847 = vmul.f32 %v829, 1.442695
        %v848 = vpow.pop %v847
        %v849 = vmul.f32 %v830, 1.442695
        %v850 = vpow.pop %v849
        %v851 = vmul.f32 %v831, 1.442695
        %v852 = vpow.pop %v851
        %v853 = vmul.f32 %v832, 1.442695
        %v854 = vpow.pop %v853
        %v855 = vmul.f32 %v833, 1.442695
        %v856 = vpow.pop %v855
        %v857 = vmul.f32 %v834, 1.442695
        %v858 = vpow.pop %v857
        %v859 = vmul.f32 %v835, 1.442695
        %v860 = vpow.pop %v859
        %v861 = vmul.f32 %v836, 1.442695
        %v862 = vpow.pop %v861
        %v863 = vmul.f32 %v837, 1.442695
        %v864 = vpow.pop %v863
        %v865 = vmul.f32 %v838, 1.442695
        %v866 = vpow.pop %v865
        %v867 = vmul.f32 %v839, 1.442695
        %v868 = vpow.pop %v867
        %v869 = vmul.f32 %v840, 1.442695
        %v870 = vpow.pop %v869
        %v871 = vmul.f32 %v841, 1.442695
        %v872 = vpow.pop %v871
        %v873 = vmul.f32 %v842, 1.442695
        %v874 = vpow.pop %v873
        %v875 = vrot.slane %v844, 4
        %v876 = vadd.f32 %v844, %v875
        %v877 = vrot.slane %v876, 2
        %v878 = vadd.f32 %v876, %v877
        %v879 = vrot.slane %v878, 1
        %v880 = vadd.f32 %v878, %v879
        %v881 = vrot.slane %v846, 4
        %v882 = vadd.f32 %v846, %v881
        %v883 = vrot.slane %v882, 2
        %v884 = vadd.f32 %v882, %v883
        %v885 = vrot.slane %v884, 1
        %v886 = vadd.f32 %v884, %v885
        %v887 = vrot.slane %v848, 4
        %v888 = vadd.f32 %v848, %v887
        %v889 = vrot.slane %v888, 2
        %v890 = vadd.f32 %v888, %v889
        %v891 = vrot.slane %v890, 1
        %v892 = vadd.f32 %v890, %v891
        %v893 = vrot.slane %v850, 4
        %v894 = vadd.f32 %v850, %v893
        %v895 = vrot.slane %v894, 2
        %v896 = vadd.f32 %v894, %v895
        %v897 = vrot.slane %v896, 1
        %v898 = vadd.f32 %v896, %v897
        %v899 = vrot.slane %v852, 4
        %v900 = vadd.f32 %v852, %v899
        %v901 = vrot.slane %v900, 2
        %v902 = vadd.f32 %v900, %v901
        %v903 = vrot.slane %v902, 1
        %v904 = vadd.f32 %v902, %v903
        %v905 = vrot.slane %v854, 4
        %v906 = vadd.f32 %v854, %v905
        %v907 = vrot.slane %v906, 2
        %v908 = vadd.f32 %v906, %v907
        %v909 = vrot.slane %v908, 1
        %v910 = vadd.f32 %v908, %v909
        %v911 = vrot.slane %v856, 4
        %v912 = vadd.f32 %v856, %v911
        %v913 = vrot.slane %v912, 2
        %v914 = vadd.f32 %v912, %v913
        %v915 = vrot.slane %v914, 1
        %v916 = vadd.f32 %v914, %v915
        %v917 = vrot.slane %v858, 4
        %v918 = vadd.f32 %v858, %v917
        %v919 = vrot.slane %v918, 2
        %v920 = vadd.f32 %v918, %v919
        %v921 = vrot.slane %v920, 1
        %v922 = vadd.f32 %v920, %v921
        %v923 = vrot.slane %v860, 4
        %v924 = vadd.f32 %v860, %v923
        %v925 = vrot.slane %v924, 2
        %v926 = vadd.f32 %v924, %v925
        %v927 = vrot.slane %v926, 1
        %v928 = vadd.f32 %v926, %v927
        %v929 = vrot.slane %v862, 4
        %v930 = vadd.f32 %v862, %v929
        %v931 = vrot.slane %v930, 2
        %v932 = vadd.f32 %v930, %v931
        %v933 = vrot.slane %v932, 1
        %v934 = vadd.f32 %v932, %v933
        %v935 = vrot.slane %v864, 4
        %v936 = vadd.f32 %v864, %v935
        %v937 = vrot.slane %v936, 2
        %v938 = vadd.f32 %v936, %v937
        %v939 = vrot.slane %v938, 1
        %v940 = vadd.f32 %v938, %v939
        %v941 = vrot.slane %v866, 4
        %v942 = vadd.f32 %v866, %v941
        %v943 = vrot.slane %v942, 2
        %v944 = vadd.f32 %v942, %v943
        %v945 = vrot.slane %v944, 1
        %v946 = vadd.f32 %v944, %v945
        %v947 = vrot.slane %v868, 4
        %v948 = vadd.f32 %v868, %v947
        %v949 = vrot.slane %v948, 2
        %v950 = vadd.f32 %v948, %v949
        %v951 = vrot.slane %v950, 1
        %v952 = vadd.f32 %v950, %v951
        %v953 = vrot.slane %v870, 4
        %v954 = vadd.f32 %v870, %v953
        %v955 = vrot.slane %v954, 2
        %v956 = vadd.f32 %v954, %v955
        %v957 = vrot.slane %v956, 1
        %v958 = vadd.f32 %v956, %v957
        %v959 = vrot.slane %v872, 4
        %v960 = vadd.f32 %v872, %v959
        %v961 = vrot.slane %v960, 2
        %v962 = vadd.f32 %v960, %v961
        %v963 = vrot.slane %v962, 1
        %v964 = vadd.f32 %v962, %v963
        %v965 = vrot.slane %v874, 4
        %v966 = vadd.f32 %v874, %v965
        %v967 = vrot.slane %v966, 2
        %v968 = vadd.f32 %v966, %v967
        %v969 = vrot.slane %v968, 1
        %v970 = vadd.f32 %v968, %v969
        %v971 = vrcp.pop %v880
        %v972 = vmul.f32 %v844, %v971
        %v973 = vrcp.pop %v886
        %v974 = vmul.f32 %v846, %v973
        %v975 = vrcp.pop %v892
        %v976 = vmul.f32 %v848, %v975
        %v977 = vrcp.pop %v898
        %v978 = vmul.f32 %v850, %v977
        %v979 = vrcp.pop %v904
        %v980 = vmul.f32 %v852, %v979
        %v981 = vrcp.pop %v910
        %v982 = vmul.f32 %v854, %v981
        %v983 = vrcp.pop %v916
        %v984 = vmul.f32 %v856, %v983
        %v985 = vrcp.pop %v922
        %v986 = vmul.f32 %v858, %v985
        %v987 = vrcp.pop %v928
        %v988 = vmul.f32 %v860, %v987
        %v989 = vrcp.pop %v934
        %v990 = vmul.f32 %v862, %v989
        %v991 = vrcp.pop %v940
        %v992 = vmul.f32 %v864, %v991
        %v993 = vrcp.pop %v946
        %v994 = vmul.f32 %v866, %v993
        %v995 = vrcp.pop %v952
        %v996 = vmul.f32 %v868, %v995
        %v997 = vrcp.pop %v958
        %v998 = vmul.f32 %v870, %v997
        %v999 = vrcp.pop %v964
        %v1000 = vmul.f32 %v872, %v999
        %v1001 = vrcp.pop %v970
        %v1002 = vmul.f32 %v874, %v1001
        %v1003 = vld [vmem:[%s335] sm:$0xff]
        %v1004 = vld [vmem:[%s335 + $0x8] sm:$0xff]
        %v1005 = vmul.f32 %v972, %v1003
        %v1006 = vmul.f32 %v974, %v1004
        %v1007 = vmul.f32 %v976, %v1003
        %v1008 = vmul.f32 %v978, %v1004
        %v1009 = vmul.f32 %v980, %v1003
        %v1010 = vmul.f32 %v982, %v1004
        %v1011 = vmul.f32 %v984, %v1003
        %v1012 = vmul.f32 %v986, %v1004
        %v1013 = vmul.f32 %v988, %v1003
        %v1014 = vmul.f32 %v990, %v1004
        %v1015 = vmul.f32 %v992, %v1003
        %v1016 = vmul.f32 %v994, %v1004
        %v1017 = vmul.f32 %v996, %v1003
        %v1018 = vmul.f32 %v998, %v1004
        %v1019 = vmul.f32 %v1000, %v1003
        %v1020 = vmul.f32 %v1002, %v1004
        %v1021 = vrot.slane %v1005, 4
        %v1022 = vadd.f32 %v1005, %v1021
        %v1023 = vrot.slane %v1022, 2
        %v1024 = vadd.f32 %v1022, %v1023
        %v1025 = vrot.slane %v1024, 1
        %v1026 = vadd.f32 %v1024, %v1025
        %v1027 = vrot.slane %v1006, 4
        %v1028 = vadd.f32 %v1006, %v1027
        %v1029 = vrot.slane %v1028, 2
        %v1030 = vadd.f32 %v1028, %v1029
        %v1031 = vrot.slane %v1030, 1
        %v1032 = vadd.f32 %v1030, %v1031
        %v1033 = vrot.slane %v1007, 4
        %v1034 = vadd.f32 %v1007, %v1033
        %v1035 = vrot.slane %v1034, 2
        %v1036 = vadd.f32 %v1034, %v1035
        %v1037 = vrot.slane %v1036, 1
        %v1038 = vadd.f32 %v1036, %v1037
        %v1039 = vrot.slane %v1008, 4
        %v1040 = vadd.f32 %v1008, %v1039
        %v1041 = vrot.slane %v1040, 2
        %v1042 = vadd.f32 %v1040, %v1041
        %v1043 = vrot.slane %v1042, 1
        %v1044 = vadd.f32 %v1042, %v1043
        %v1045 = vrot.slane %v1009, 4
        %v1046 = vadd.f32 %v1009, %v1045
        %v1047 = vrot.slane %v1046, 2
        %v1048 = vadd.f32 %v1046, %v1047
        %v1049 = vrot.slane %v1048, 1
        %v1050 = vadd.f32 %v1048, %v1049
        %v1051 = vrot.slane %v1010, 4
        %v1052 = vadd.f32 %v1010, %v1051
        %v1053 = vrot.slane %v1052, 2
        %v1054 = vadd.f32 %v1052, %v1053
        %v1055 = vrot.slane %v1054, 1
        %v1056 = vadd.f32 %v1054, %v1055
        %v1057 = vrot.slane %v1011, 4
        %v1058 = vadd.f32 %v1011, %v1057
        %v1059 = vrot.slane %v1058, 2
        %v1060 = vadd.f32 %v1058, %v1059
        %v1061 = vrot.slane %v1060, 1
        %v1062 = vadd.f32 %v1060, %v1061
        %v1063 = vrot.slane %v1012, 4
        %v1064 = vadd.f32 %v1012, %v1063
        %v1065 = vrot.slane %v1064, 2
        %v1066 = vadd.f32 %v1064, %v1065
        %v1067 = vrot.slane %v1066, 1
        %v1068 = vadd.f32 %v1066, %v1067
        %v1069 = vrot.slane %v1013, 4
        %v1070 = vadd.f32 %v1013, %v1069
        %v1071 = vrot.slane %v1070, 2
        %v1072 = vadd.f32 %v1070, %v1071
        %v1073 = vrot.slane %v1072, 1
        %v1074 = vadd.f32 %v1072, %v1073
        %v1075 = vrot.slane %v1014, 4
        %v1076 = vadd.f32 %v1014, %v1075
        %v1077 = vrot.slane %v1076, 2
        %v1078 = vadd.f32 %v1076, %v1077
        %v1079 = vrot.slane %v1078, 1
        %v1080 = vadd.f32 %v1078, %v1079
        %v1081 = vrot.slane %v1015, 4
        %v1082 = vadd.f32 %v1015, %v1081
        %v1083 = vrot.slane %v1082, 2
        %v1084 = vadd.f32 %v1082, %v1083
        %v1085 = vrot.slane %v1084, 1
        %v1086 = vadd.f32 %v1084, %v1085
        %v1087 = vrot.slane %v1016, 4
        %v1088 = vadd.f32 %v1016, %v1087
        %v1089 = vrot.slane %v1088, 2
        %v1090 = vadd.f32 %v1088, %v1089
        %v1091 = vrot.slane %v1090, 1
        %v1092 = vadd.f32 %v1090, %v1091
        %v1093 = vrot.slane %v1017, 4
        %v1094 = vadd.f32 %v1017, %v1093
        %v1095 = vrot.slane %v1094, 2
        %v1096 = vadd.f32 %v1094, %v1095
        %v1097 = vrot.slane %v1096, 1
        %v1098 = vadd.f32 %v1096, %v1097
        %v1099 = vrot.slane %v1018, 4
        %v1100 = vadd.f32 %v1018, %v1099
        %v1101 = vrot.slane %v1100, 2
        %v1102 = vadd.f32 %v1100, %v1101
        %v1103 = vrot.slane %v1102, 1
        %v1104 = vadd.f32 %v1102, %v1103
        %v1105 = vrot.slane %v1019, 4
        %v1106 = vadd.f32 %v1019, %v1105
        %v1107 = vrot.slane %v1106, 2
        %v1108 = vadd.f32 %v1106, %v1107
        %v1109 = vrot.slane %v1108, 1
        %v1110 = vadd.f32 %v1108, %v1109
        %v1111 = vrot.slane %v1020, 4
        %v1112 = vadd.f32 %v1020, %v1111
        %v1113 = vrot.slane %v1112, 2
        %v1114 = vadd.f32 %v1112, %v1113
        %v1115 = vrot.slane %v1114, 1
        %v1116 = vadd.f32 %v1114, %v1115
        %vm1133 = vcmask 1041409
        %v1134 = vsel %vm1133, %v1038, %v1026
        %vm1135 = vcmask 1042434
        %v1136 = vsel %vm1135, %v1050, %v1134
        %vm1137 = vcmask 1043459
        %v1138 = vsel %vm1137, %v1062, %v1136
        %vm1139 = vcmask 1044484
        %v1140 = vsel %vm1139, %v1074, %v1138
        %vm1141 = vcmask 1045509
        %v1142 = vsel %vm1141, %v1086, %v1140
        %vm1143 = vcmask 1046534
        %v1144 = vsel %vm1143, %v1098, %v1142
        %vm1145 = vcmask 1047559
        %v1146 = vsel %vm1145, %v1110, %v1144
        %v1147 = vsel %vm1133, %v1044, %v1032
        %v1148 = vsel %vm1135, %v1056, %v1147
        %v1149 = vsel %vm1137, %v1068, %v1148
        %v1150 = vsel %vm1139, %v1080, %v1149
        %v1151 = vsel %vm1141, %v1092, %v1150
        %v1152 = vsel %vm1143, %v1104, %v1151
        %v1153 = vsel %vm1145, %v1116, %v1152
        %1156 = vst [vmem:[%s362] sm:$0xff] %v1146
        %1157 = vst [vmem:[%s362 + $0x8] sm:$0xff] %v1153
        %s1158 = scalar_lea.vmem %s335, 16 [#allocation4]
        %v1159 = vld [vmem:[%s1158] sm:$0xff]
        %v1160 = vld [vmem:[%s1158 + $0x8] sm:$0xff]
        %v1161 = vmul.f32 %v972, %v1159
        %v1162 = vmul.f32 %v974, %v1160
        %v1163 = vmul.f32 %v976, %v1159
        %v1164 = vmul.f32 %v978, %v1160
        %v1165 = vmul.f32 %v980, %v1159
        %v1166 = vmul.f32 %v982, %v1160
        %v1167 = vmul.f32 %v984, %v1159
        %v1168 = vmul.f32 %v986, %v1160
        %v1169 = vmul.f32 %v988, %v1159
        %v1170 = vmul.f32 %v990, %v1160
        %v1171 = vmul.f32 %v992, %v1159
        %v1172 = vmul.f32 %v994, %v1160
        %v1173 = vmul.f32 %v996, %v1159
        %v1174 = vmul.f32 %v998, %v1160
        %v1175 = vmul.f32 %v1000, %v1159
        %v1176 = vmul.f32 %v1002, %v1160
        %v1177 = vrot.slane %v1161, 4
        %v1178 = vadd.f32 %v1161, %v1177
        %v1179 = vrot.slane %v1178, 2
        %v1180 = vadd.f32 %v1178, %v1179
        %v1181 = vrot.slane %v1180, 1
        %v1182 = vadd.f32 %v1180, %v1181
        %v1183 = vrot.slane %v1162, 4
        %v1184 = vadd.f32 %v1162, %v1183
        %v1185 = vrot.slane %v1184, 2
        %v1186 = vadd.f32 %v1184, %v1185
        %v1187 = vrot.slane %v1186, 1
        %v1188 = vadd.f32 %v1186, %v1187
        %v1189 = vrot.slane %v1163, 4
        %v1190 = vadd.f32 %v1163, %v1189
        %v1191 = vrot.slane %v1190, 2
        %v1192 = vadd.f32 %v1190, %v1191
        %v1193 = vrot.slane %v1192, 1
        %v1194 = vadd.f32 %v1192, %v1193
        %v1195 = vrot.slane %v1164, 4
        %v1196 = vadd.f32 %v1164, %v1195
        %v1197 = vrot.slane %v1196, 2
        %v1198 = vadd.f32 %v1196, %v1197
        %v1199 = vrot.slane %v1198, 1
        %v1200 = vadd.f32 %v1198, %v1199
        %v1201 = vrot.slane %v1165, 4
        %v1202 = vadd.f32 %v1165, %v1201
        %v1203 = vrot.slane %v1202, 2
        %v1204 = vadd.f32 %v1202, %v1203
        %v1205 = vrot.slane %v1204, 1
        %v1206 = vadd.f32 %v1204, %v1205
        %v1207 = vrot.slane %v1166, 4
        %v1208 = vadd.f32 %v1166, %v1207
        %v1209 = vrot.slane %v1208, 2
        %v1210 = vadd.f32 %v1208, %v1209
        %v1211 = vrot.slane %v1210, 1
        %v1212 = vadd.f32 %v1210, %v1211
        %v1213 = vrot.slane %v1167, 4
        %v1214 = vadd.f32 %v1167, %v1213
        %v1215 = vrot.slane %v1214, 2
        %v1216 = vadd.f32 %v1214, %v1215
        %v1217 = vrot.slane %v1216, 1
        %v1218 = vadd.f32 %v1216, %v1217
        %v1219 = vrot.slane %v1168, 4
        %v1220 = vadd.f32 %v1168, %v1219
        %v1221 = vrot.slane %v1220, 2
        %v1222 = vadd.f32 %v1220, %v1221
        %v1223 = vrot.slane %v1222, 1
        %v1224 = vadd.f32 %v1222, %v1223
        %v1225 = vrot.slane %v1169, 4
        %v1226 = vadd.f32 %v1169, %v1225
        %v1227 = vrot.slane %v1226, 2
        %v1228 = vadd.f32 %v1226, %v1227
        %v1229 = vrot.slane %v1228, 1
        %v1230 = vadd.f32 %v1228, %v1229
        %v1231 = vrot.slane %v1170, 4
        %v1232 = vadd.f32 %v1170, %v1231
        %v1233 = vrot.slane %v1232, 2
        %v1234 = vadd.f32 %v1232, %v1233
        %v1235 = vrot.slane %v1234, 1
        %v1236 = vadd.f32 %v1234, %v1235
        %v1237 = vrot.slane %v1171, 4
        %v1238 = vadd.f32 %v1171, %v1237
        %v1239 = vrot.slane %v1238, 2
        %v1240 = vadd.f32 %v1238, %v1239
        %v1241 = vrot.slane %v1240, 1
        %v1242 = vadd.f32 %v1240, %v1241
        %v1243 = vrot.slane %v1172, 4
        %v1244 = vadd.f32 %v1172, %v1243
        %v1245 = vrot.slane %v1244, 2
        %v1246 = vadd.f32 %v1244, %v1245
        %v1247 = vrot.slane %v1246, 1
        %v1248 = vadd.f32 %v1246, %v1247
        %v1249 = vrot.slane %v1173, 4
        %v1250 = vadd.f32 %v1173, %v1249
        %v1251 = vrot.slane %v1250, 2
        %v1252 = vadd.f32 %v1250, %v1251
        %v1253 = vrot.slane %v1252, 1
        %v1254 = vadd.f32 %v1252, %v1253
        %v1255 = vrot.slane %v1174, 4
        %v1256 = vadd.f32 %v1174, %v1255
        %v1257 = vrot.slane %v1256, 2
        %v1258 = vadd.f32 %v1256, %v1257
        %v1259 = vrot.slane %v1258, 1
        %v1260 = vadd.f32 %v1258, %v1259
        %v1261 = vrot.slane %v1175, 4
        %v1262 = vadd.f32 %v1175, %v1261
        %v1263 = vrot.slane %v1262, 2
        %v1264 = vadd.f32 %v1262, %v1263
        %v1265 = vrot.slane %v1264, 1
        %v1266 = vadd.f32 %v1264, %v1265
        %v1267 = vrot.slane %v1176, 4
        %v1268 = vadd.f32 %v1176, %v1267
        %v1269 = vrot.slane %v1268, 2
        %v1270 = vadd.f32 %v1268, %v1269
        %v1271 = vrot.slane %v1270, 1
        %v1272 = vadd.f32 %v1270, %v1271
        %v1289 = vsel %vm1133, %v1194, %v1182
        %v1290 = vsel %vm1135, %v1206, %v1289
        %v1291 = vsel %vm1137, %v1218, %v1290
        %v1292 = vsel %vm1139, %v1230, %v1291
        %v1293 = vsel %vm1141, %v1242, %v1292
        %v1294 = vsel %vm1143, %v1254, %v1293
        %v1295 = vsel %vm1145, %v1266, %v1294
        %v1296 = vsel %vm1133, %v1200, %v1188
        %v1297 = vsel %vm1135, %v1212, %v1296
        %v1298 = vsel %vm1137, %v1224, %v1297
        %v1299 = vsel %vm1139, %v1236, %v1298
        %v1300 = vsel %vm1141, %v1248, %v1299
        %v1301 = vsel %vm1143, %v1260, %v1300
        %v1302 = vsel %vm1145, %v1272, %v1301
        %s1305 = scalar_lea.vmem %s362, 16 [#allocation5]
        %1306 = vst [vmem:[%s1305] sm:$0xff] %v1295
        %1307 = vst [vmem:[%s1305 + $0x8] sm:$0xff] %v1302
        %s1308 = sand.u32 %s152, 1
        %s1309 = sand.u32 %s152, 1
        %s1310 = smul.addr %s1309, 32
        %s1311 = scalar_lea.vmem [#allocation5], %s1310
        // Predicated region
        $region102: #{tlg_attention.4} parent=88 // pred_check
          %p1312 = pneg %p162
        $region103: #{tlg_attention.4} parent=88 // pred_check_branch
          %1314 = sbr.rel (%p1312) target = $region105
        $region104: #{tlg_attention.4} parent=88 // pred_region
          %s1315 = smul.u32 2, %s14
          %s1316 = smul.addr %s1315, 8
          %s1317 = scalar_lea.vmem %s3, %s1316
          // Predicated region
          $region106: #{tlg_attention.4} parent=104 // pred_check
            _
          $region107: #{tlg_attention.4} parent=104 // pred_check_branch
            %1319 = sbr.rel (0) target = $region109
          $region108: #{tlg_attention.4} parent=104 // pred_region
            // Predicated region
            $region110: #{tlg_attention.4} parent=108 // pred_check
              _
            $region111: #{tlg_attention.4} parent=108 // pred_check_branch
              %1321 = sbr.rel (0) target = $region113
            $region112: #{tlg_attention.4} parent=108 // pred_region
              loop: start=0, step=1, limit=1
              $region114: #{tlg_attention.4} parent=112 // loop_pre_header
                _
              $region115: #{tlg_attention.4} parent=112 // loop_header
                %s1323 = sphi 0, %s1327
                %p1324 = scmp.ge.s32.totalorder %s1323, 1
                %s1328 = sphi %s1311, %s1311
                %s1329 = sphi %s1317, %s1317
              $region116: #{tlg_attention.4} parent=112 // loop_header_branch
                %1326 = sbr.rel (%p1324) target = $region120
              $region117: #{tlg_attention.4} parent=112 // loop_body
                %v1330 = vld [vmem:[%s1328] sm:$0xff]
                %1331 = vst [vmem:[%s1329] sm:$0xff] %v1330
                %v1332 = vld [vmem:[%s1328 + $0x8] sm:$0xff]
                %1333 = vst [vmem:[%s1329 + $0x8] sm:$0xff] %v1332
                %v1334 = vld [vmem:[%s1328 + $0x10] sm:$0xff]
                %1335 = vst [vmem:[%s1329 + $0x100] sm:$0xff] %v1334
                %v1336 = vld [vmem:[%s1328 + $0x18] sm:$0xff]
                %1337 = vst [vmem:[%s1329 + $0x108] sm:$0xff] %v1336
              $region118: #{tlg_attention.4} parent=112 // loop_footer
                %s1327 = sadd.s32 1, %s1323
              $region119: #{tlg_attention.4} parent=112 // loop_footer_branch
                %1322 = sbr.rel target = $region115
              $region120: #{tlg_attention.4} parent=112 // loop_exit
                _
            $region113: #{tlg_attention.4} parent=108 // pred_fallthru
              _
            // Predicated region
            $region121: #{tlg_attention.4} parent=108 // pred_check
              _
            $region122: #{tlg_attention.4} parent=108 // pred_check_branch
              %1339 = sbr.rel target = $region124
            $region123: #{tlg_attention.4} parent=108 // pred_region
              _
            $region124: #{tlg_attention.4} parent=108 // pred_fallthru
              _
          $region109: #{tlg_attention.4} parent=104 // pred_fallthru
            _
          %1340 = vnop
        $region105: #{tlg_attention.4} parent=88 // pred_fallthru
          _
      $region89: #{tlg_attention.4} parent=5 // pred_fallthru
        _
      %p1341 = scmp.le.s32.totalorder 2, %s9
      // Predicated region
      $region125: #{tlg_attention.4} parent=5 // pred_check
        %p1342 = pneg %p1341
      $region126: #{tlg_attention.4} parent=5 // pred_check_branch
        %1344 = sbr.rel (%p1342) target = $region128
      $region127: #{tlg_attention.4} parent=5 // pred_region
        %s1345 = ssub.s32 %s9, 2
        // Predicated region
        $region129: #{tlg_attention.4} parent=127 // pred_check
          %p1346 = pneg %p168
        $region130: #{tlg_attention.4} parent=127 // pred_check_branch
          %1348 = sbr.rel (%p1346) target = $region132
        $region131: #{tlg_attention.4} parent=127 // pred_region
          %s1349 = sand.u32 %s153, 1
          %s1350 = sand.u32 %s153, 1
          %s1351 = smul.addr %s1350, 32
          %s1352 = scalar_lea.vmem [#allocation5], %s1351
        $region132: #{tlg_attention.4} parent=127 // pred_fallthru
          _
      $region128: #{tlg_attention.4} parent=5 // pred_fallthru
        _
    $region6: #{tlg_attention.4} parent=1 // loop_footer
      %s13 = sadd.s32 1, %s9
    $region7: #{tlg_attention.4} parent=1 // loop_footer_branch
      %8 = sbr.rel target = $region3
    $region8: #{tlg_attention.4} parent=1 // loop_exit
      _

// kernel: tlg_attention.5
$region0: #{tlg_attention.5}
  #allocation0 [shape = 'u32[]', space=smem, size = 0x4, offset = 0x4, fixed_abs, tag = 'smem constant byte address 0x4 - core index']
  #allocation1 [shape = 'u32[144,128]{1,0:T(1,128)}', space=vmem, size = 0x12000, scoped, tag = 'internal scratch']
  %s0 = inlined_call_operand.vmem [shape: f32[2,64,512], index: 0, kind: input, shape index: {}]
  %s1 = inlined_call_operand.vmem [shape: bf16[16,48], index: 1, kind: input, shape index: {}]
  %s2 = inlined_call_operand.vmem [shape: f32[16,1], index: 2, kind: input, shape index: {}]
  %s3 = inlined_call_operand.vmem [shape: f32[2,4,16,512], index: 3, kind: output, shape index: {}]
  %s4 = sld [smem:[#allocation0]]
  $region45: #{tlg_attention.5} parent=0
    _
  %s6 = ssub.s32 1, %s4
  %s7 = scalar_select 0, %s6, %s4
  loop: start=0, step=1, limit=6
  $region2: #{tlg_attention.5} parent=0 // loop_pre_header
    _
  $region3: #{tlg_attention.5} parent=0 // loop_header
    %s9 = sphi 0, %s13
    %p10 = scmp.ge.s32.totalorder %s9, 6
    %s16 = sphi 0, %s28
    %s17 = sphi 0, %s24
    %s18 = sphi 0, %s16
    %s19 = sphi 0, %s17
    %s20 = sphi 0, %s18
    %s21 = sphi 0, %s19
    %s33 = sphi 0, %s35
    %s36 = sphi 0, %s33
    %s37 = sphi 0, %s36
    %s53 = sphi 0, %s37
    %s57 = sphi 0, %s57
    %s59 = sphi 0, %s57
    %s60 = sphi 0, %s59
    %s74 = sphi 0, %s60
    %s78 = sphi 0, %s78
    %s80 = sphi 0, %s78
    %s81 = sphi 0, %s80
    %s95 = sphi 0, %s81
    %s103 = sphi 0, %s105
    %s106 = sphi 0, %s103
    %s107 = sphi 0, %s106
    %s123 = sphi 0, %s107
  $region4: #{tlg_attention.5} parent=0 // loop_header_branch
    %12 = sbr.rel (%p10) target = $region8
  $region5: #{tlg_attention.5} parent=0 // loop_body
    %s14 = ssub.s32 %s9, 1
    %s15 = ssub.s32 %s9, 2
    %s22 = sadd.s32 1, %s17
    %p23 = scmp.ge.s32.totalorder %s22, 2
    %s24 = scalar_select %p23, 0, %s22
    %s25 = sadd.s32 1, %s16
    %s26 = scalar_select %p23, %s25, %s16
    %p27 = scmp.ge.s32.totalorder %s26, 2
    %s28 = scalar_select %p27, 0, %s26
    %s29 = ssub.s32 %s16, %s28
    %s30 = ssub.s32 %s17, %s24
    %s31 = sor.u32 %s29, %s30
    %p32 = scmp.eq.s32.totalorder %s31, 0
    %s34 = sadd.s32 %s33, 1
    %s35 = scalar_select %p32, %s33, %s34
    %p38 = pneg %p32
    %p39 = scmp.eq.s32.totalorder %s9, 3
    %p40 = por %p38, %p39
    %p41 = scmp.ne.s32.totalorder %s33, %s36
    %p42 = scmp.eq.s32.totalorder %s9, 0
    %p43 = por %p41, %p42
    %p44 = scmp.ne.s32.totalorder %s33, %s36
    %p45 = scmp.eq.s32.totalorder %s14, 3
    %p46 = por %p44, %p45
    %p47 = scmp.ne.s32.totalorder %s36, %s37
    %p48 = scmp.eq.s32.totalorder %s14, 0
    %p49 = por %p47, %p48
    %p50 = scmp.ne.s32.totalorder %s36, %s37
    %p51 = scmp.eq.s32.totalorder %s15, 3
    %p52 = por %p50, %p51
    %p54 = scmp.ne.s32.totalorder %s37, %s53
    %p55 = scmp.eq.s32.totalorder %s15, 0
    %p56 = por %p54, %p55
    %s58 = sadd.s32 %s57, 1
    %p61 = scmp.eq.s32.totalorder %s9, 3
    %p62 = scmp.ne.s32.totalorder %s57, %s59
    %p63 = scmp.eq.s32.totalorder %s9, 0
    %p64 = por %p62, %p63
    %p65 = scmp.ne.s32.totalorder %s57, %s59
    %p66 = scmp.eq.s32.totalorder %s14, 3
    %p67 = por %p65, %p66
    %p68 = scmp.ne.s32.totalorder %s59, %s60
    %p69 = scmp.eq.s32.totalorder %s14, 0
    %p70 = por %p68, %p69
    %p71 = scmp.ne.s32.totalorder %s59, %s60
    %p72 = scmp.eq.s32.totalorder %s15, 3
    %p73 = por %p71, %p72
    %p75 = scmp.ne.s32.totalorder %s60, %s74
    %p76 = scmp.eq.s32.totalorder %s15, 0
    %p77 = por %p75, %p76
    %s79 = sadd.s32 %s78, 1
    %p82 = scmp.eq.s32.totalorder %s9, 3
    %p83 = scmp.ne.s32.totalorder %s78, %s80
    %p84 = scmp.eq.s32.totalorder %s9, 0
    %p85 = por %p83, %p84
    %p86 = scmp.ne.s32.totalorder %s78, %s80
    %p87 = scmp.eq.s32.totalorder %s14, 3
    %p88 = por %p86, %p87
    %p89 = scmp.ne.s32.totalorder %s80, %s81
    %p90 = scmp.eq.s32.totalorder %s14, 0
    %p91 = por %p89, %p90
    %p92 = scmp.ne.s32.totalorder %s80, %s81
    %p93 = scmp.eq.s32.totalorder %s15, 3
    %p94 = por %p92, %p93
    %p96 = scmp.ne.s32.totalorder %s81, %s95
    %p97 = scmp.eq.s32.totalorder %s15, 0
    %p98 = por %p96, %p97
    %s99 = ssub.s32 %s16, %s28
    %s100 = ssub.s32 %s17, %s24
    %s101 = sor.u32 %s99, %s100
    %p102 = scmp.eq.s32.totalorder %s101, 0
    %s104 = sadd.s32 %s103, 1
    %s105 = scalar_select %p102, %s103, %s104
    %p108 = pneg %p102
    %p109 = scmp.eq.s32.totalorder %s9, 3
    %p110 = por %p108, %p109
    %p111 = scmp.ne.s32.totalorder %s103, %s106
    %p112 = scmp.eq.s32.totalorder %s9, 0
    %p113 = por %p111, %p112
    %p114 = scmp.ne.s32.totalorder %s103, %s106
    %p115 = scmp.eq.s32.totalorder %s14, 3
    %p116 = por %p114, %p115
    %p117 = scmp.ne.s32.totalorder %s106, %s107
    %p118 = scmp.eq.s32.totalorder %s14, 0
    %p119 = por %p117, %p118
    %p120 = scmp.ne.s32.totalorder %s106, %s107
    %p121 = scmp.eq.s32.totalorder %s15, 3
    %p122 = por %p120, %p121
    %p124 = scmp.ne.s32.totalorder %s107, %s123
    %p125 = scmp.eq.s32.totalorder %s15, 0
    %p126 = por %p124, %p125
    %p127 = scmp.le.s32.totalorder 1, %s9
    %p128 = scmp.lt.s32.totalorder %s9, 5
    %p129 = pnand %p127, %p128
    %p130 = pneg %p129
    // Predicated region
    $region9: #{tlg_attention.5} parent=5 // pred_check
      _
    $region10: #{tlg_attention.5} parent=5 // pred_check_branch
      %132 = sbr.rel (%p129) target = $region12
    $region11: #{tlg_attention.5} parent=5 // pred_region
      %s133 = ssub.s32 %s9, 1
      // Predicated region
      $region13: #{tlg_attention.5} parent=11 // pred_check
        %p134 = pneg %p70
      $region14: #{tlg_attention.5} parent=11 // pred_check_branch
        %136 = sbr.rel (%p134) target = $region16
      $region15: #{tlg_attention.5} parent=11 // pred_region
        _
      $region16: #{tlg_attention.5} parent=11 // pred_fallthru
        _
      // Predicated region
      $region17: #{tlg_attention.5} parent=11 // pred_check
        %p137 = pneg %p91
      $region18: #{tlg_attention.5} parent=11 // pred_check_branch
        %139 = sbr.rel (%p137) target = $region20
      $region19: #{tlg_attention.5} parent=11 // pred_region
        _
      $region20: #{tlg_attention.5} parent=11 // pred_fallthru
        _
    $region12: #{tlg_attention.5} parent=5 // pred_fallthru
      _
    %p140 = scmp.lt.s32.totalorder %s9, 4
    // Predicated region
    $region21: #{tlg_attention.5} parent=5 // pred_check
      %p141 = pneg %p140
    $region22: #{tlg_attention.5} parent=5 // pred_check_branch
      %143 = sbr.rel (%p141) target = $region24
    $region23: #{tlg_attention.5} parent=5 // pred_region
      // Predicated region
      $region25: #{tlg_attention.5} parent=23 // pred_check
        %p144 = pneg %p43
      $region26: #{tlg_attention.5} parent=23 // pred_check_branch
        %146 = sbr.rel (%p144) target = $region28
      $region27: #{tlg_attention.5} parent=23 // pred_region
        %s147 = smul.u32 4, %s17
        %p148 = scmp.lt.s32.totalorder %s16, 1
        %s149 = scalar_select %p148, %s16, 1
        %p150 = scmp.lt.s32.totalorder %s147, 7
        %s151 = scalar_select %p150, %s147, 7
        %s152 = smul.addr %s151, 4
        %s153 = smul.addr %s149, 32
        %s154 = sadd.s32 %s152, %s153
        %s155 = smul.addr %s154, 8
        %s156 = scalar_lea.vmem %s0, %s155
        %s157 = smul.u32 4, %s17
      $region28: #{tlg_attention.5} parent=23 // pred_fallthru
        _
    $region24: #{tlg_attention.5} parent=5 // pred_fallthru
      _
    %p158 = scmp.le.s32.totalorder 1, %s9
    %p159 = scmp.lt.s32.totalorder %s9, 5
    %p160 = pnand %p158, %p159
    %p161 = pneg %p160
    // Predicated region
    $region29: #{tlg_attention.5} parent=5 // pred_check
      _
    $region30: #{tlg_attention.5} parent=5 // pred_check_branch
      %163 = sbr.rel (%p160) target = $region32
    $region31: #{tlg_attention.5} parent=5 // pred_region
      %s164 = ssub.s32 %s9, 1
      %s165 = smul.u32 4, %s19
      %p166 = scmp.lt.s32.totalorder %s18, 1
      %s167 = scalar_select %p166, %s18, 1
      %p168 = scmp.lt.s32.totalorder %s165, 7
      %s169 = scalar_select %p168, %s165, 7
      %s170 = smul.addr %s169, 4
      %s171 = smul.addr %s167, 32
      %s172 = sadd.s32 %s170, %s171
      %s173 = smul.addr %s172, 8
      %s174 = scalar_lea.vmem %s0, %s173
      %p175 = pneg %p49
      %p176 = pneg %p46
      %p177 = pneg %p70
      %p178 = pneg %p67
      %p179 = pneg %p91
      %p180 = pneg %p88
      %p181 = pneg %p119
      %p182 = pneg %p116
      %s183 = smul.u32 2, %s19
      %p184 = scmp.lt.s32.totalorder %s18, 1
      %s185 = scalar_select %p184, %s18, 1
      %p186 = scmp.lt.s32.totalorder %s183, 3
      %s187 = scalar_select %p186, %s183, 3
      %s188 = smul.addr %s187, 8
      %s189 = smul.addr %s185, 32
      %s190 = sadd.s32 %s188, %s189
      %s191 = smul.addr %s190, 8
      %s192 = scalar_lea.vmem %s3, %s191
      %s193 = smul.u32 4, %s19
      %p194 = scmp.lt.s32.totalorder %s18, 1
      %s195 = scalar_select %p194, %s18, 1
      %p196 = scmp.lt.s32.totalorder %s193, 7
      %s197 = scalar_select %p196, %s193, 7
      %s198 = smul.addr %s197, 4
      %s199 = smul.addr %s195, 32
      %s200 = sadd.s32 %s198, %s199
      %s201 = smul.addr %s200, 8
      %s202 = scalar_lea.vmem %s0, %s201
      %s203 = smul.u32 4, %s19
      %s204 = smul.u32 2, %s19
      %p205 = scmp.lt.s32.totalorder %s18, 1
      %s206 = scalar_select %p205, %s18, 1
      %p207 = scmp.lt.s32.totalorder %s204, 3
      %s208 = scalar_select %p207, %s204, 3
      %s209 = smul.addr %s208, 8
      %s210 = smul.addr %s206, 32
      %s211 = sadd.s32 %s209, %s210
      %s212 = smul.addr %s211, 8
      %s213 = scalar_lea.vmem %s3, %s212
      %s214 = smul.u32 2, %s19
      %v216 = vld [vmem:[%s2] sm:$0xff]
      %v217 = vld [vmem:[%s2 + $0x8] sm:$0xff]
      %v218 = vld [vmem:[%s202] sm:$0xff]
      %v219 = vld [vmem:[%s202 + $0x8] sm:$0xff]
      %v220 = vld [vmem:[%s202 + $0x10] sm:$0xff]
      %v221 = vld [vmem:[%s202 + $0x18] sm:$0xff]
      %v222 = vld [vmem:[%s202 + $0x20] sm:$0xff]
      %v223 = vld [vmem:[%s202 + $0x28] sm:$0xff]
      %v224 = vld [vmem:[%s202 + $0x30] sm:$0xff]
      %v225 = vld [vmem:[%s202 + $0x38] sm:$0xff]
      %v226 = vld [vmem:[%s202 + $0x40] sm:$0xff]
      %v227 = vld [vmem:[%s202 + $0x48] sm:$0xff]
      %v228 = vld [vmem:[%s202 + $0x50] sm:$0xff]
      %v229 = vld [vmem:[%s202 + $0x58] sm:$0xff]
      %v230 = vld [vmem:[%s202 + $0x60] sm:$0xff]
      %v231 = vld [vmem:[%s202 + $0x68] sm:$0xff]
      %v232 = vld [vmem:[%s202 + $0x70] sm:$0xff]
      %v233 = vld [vmem:[%s202 + $0x78] sm:$0xff]
      %v234 = vpack.c.bf16 %v222, %v218
      %v235 = vpack.c.bf16 %v223, %v219
      %v236 = vpack.c.bf16 %v224, %v220
      %v237 = vpack.c.bf16 %v225, %v221
      %v238 = vpack.c.bf16 %v230, %v226
      %v239 = vpack.c.bf16 %v231, %v227
      %v240 = vpack.c.bf16 %v232, %v228
      %v241 = vpack.c.bf16 %v233, %v229
      %v242 = vld [vmem:[%s1] sm:$0xf]
      %v243 = vld [vmem:[%s1 + $0x4] sm:$0xf]
      %245 = vset.pattern.permute.xlu0 0
      %246 = vperm.xlu0 %245, %v216
      %v247 = vpop.permute.xlu0 %246
      %250 = vset.pattern.permute.xlu0 0
      %251 = vperm.xlu0 %250, %v217
      %v252 = vpop.permute.xlu0 %251
      %v256 = vunpack.c.l.b16 %v242
      %v257 = vunpack.c.l.b16 %v243
      %v258 = vpack.c.b16 %v257, %v256
      %259 = vrot.lane.b32.xlu0 %v258, 112
      %v260 = vpop.permute.xlu0 %259
      %vm261 = vcmask 261120
      %v263 = vsel %vm261, %v260, 0
      %265 = vmatprep.subr.bf16.mxu0 0
      %266 = vmatpush1.bf16.msra.mxu0 0
      %267 = vmatprep.subr.bf16.mxu0 0
      %268 = vmatpush1.bf16.msra.mxu0 0
      %269 = vmatprep.subr.bf16.mxu0 0
      %270 = vmatpush1.bf16.msra.mxu0 0
      %271 = vmatprep.subr.bf16.mxu0 0
      %272 = vmatpush1.bf16.msra.mxu0 0
      %273 = vmatprep.subr.bf16.mxu0 0
      %274 = vmatpush1.bf16.msra.mxu0 0
      %275 = vmatprep.subr.bf16.mxu0 0
      %276 = vmatpush1.bf16.msra.mxu0 0
      %277 = vmatprep.subr.bf16.mxu0 %v239
      %278 = vmatpush1.bf16.msra.mxu0 %v238
      %279 = vmatprep.subr.bf16.mxu0 %v235
      %280 = vmatpush1.bf16.msra.mxu0 %v234
      %281 = vmatprep.subr.bf16.mxu0 0
      %282 = vmatpush2.bf16.msra.mxu0 0
      %283 = vmatprep.subr.bf16.mxu0 0
      %284 = vmatpush2.bf16.msra.mxu0 0
      %285 = vmatprep.subr.bf16.mxu0 0
      %286 = vmatpush2.bf16.msra.mxu0 0
      %287 = vmatprep.subr.bf16.mxu0 0
      %288 = vmatpush2.bf16.msra.mxu0 0
      %289 = vmatprep.subr.bf16.mxu0 0
      %290 = vmatpush2.bf16.msra.mxu0 0
      %291 = vmatprep.subr.bf16.mxu0 0
      %292 = vmatpush2.bf16.msra.mxu0 0
      %293 = vmatprep.subr.bf16.mxu0 0
      %294 = vmatpush2.bf16.msra.mxu0 0
      %295 = vmatprep.subr.bf16.mxu0 0
      %296 = vmatpush2.bf16.msra.mxu0 0
      %297 = vmatprep.mubr.bf16.mxu0 0
      %298 = vmatmul.mubr.bf16.gmra.mxu0 %v263
      %v299 = vpop.f32.mrf.mxu0
      %v300 = vadd.f32 %v247, %v299
      %v301 = vpop.f32.mrf.mxu0
      %v302 = vadd.f32 %v247, %v301
      %v303 = vpop.f32.mrf.mxu0
      %v304 = vadd.f32 %v252, %v303
      %v305 = vpop.f32.mrf.mxu0
      %v306 = vadd.f32 %v252, %v305
      %307 = vdwg.mxu0
      %308 = vmatprep.subr.bf16.mxu0 0
      %309 = vmatpush1.bf16.msra.mxu0 0
      %310 = vmatprep.subr.bf16.mxu0 0
      %311 = vmatpush1.bf16.msra.mxu0 0
      %312 = vmatprep.subr.bf16.mxu0 0
      %313 = vmatpush1.bf16.msra.mxu0 0
      %314 = vmatprep.subr.bf16.mxu0 0
      %315 = vmatpush1.bf16.msra.mxu0 0
      %316 = vmatprep.subr.bf16.mxu0 0
      %317 = vmatpush1.bf16.msra.mxu0 0
      %318 = vmatprep.subr.bf16.mxu0 0
      %319 = vmatpush1.bf16.msra.mxu0 0
      %320 = vmatprep.subr.bf16.mxu0 %v241
      %321 = vmatpush1.bf16.msra.mxu0 %v240
      %322 = vmatprep.subr.bf16.mxu0 %v237
      %323 = vmatpush1.bf16.msra.mxu0 %v236
      %324 = vmatprep.subr.bf16.mxu0 0
      %325 = vmatpush2.bf16.msra.mxu0 0
      %326 = vmatprep.subr.bf16.mxu0 0
      %327 = vmatpush2.bf16.msra.mxu0 0
      %328 = vmatprep.subr.bf16.mxu0 0
      %329 = vmatpush2.bf16.msra.mxu0 0
      %330 = vmatprep.subr.bf16.mxu0 0
      %331 = vmatpush2.bf16.msra.mxu0 0
      %332 = vmatprep.subr.bf16.mxu0 0
      %333 = vmatpush2.bf16.msra.mxu0 0
      %334 = vmatprep.subr.bf16.mxu0 0
      %335 = vmatpush2.bf16.msra.mxu0 0
      %336 = vmatprep.subr.bf16.mxu0 0
      %337 = vmatpush2.bf16.msra.mxu0 0
      %338 = vmatprep.subr.bf16.mxu0 0
      %339 = vmatpush2.bf16.msra.mxu0 0
      %340 = vmatprep.mubr.bf16.mxu0 0
      %341 = vmatmul.mubr.bf16.gmra.mxu0 %v263
      %v342 = vpop.f32.mrf.mxu0
      %v343 = vadd.f32 %v247, %v342
      %v344 = vpop.f32.mrf.mxu0
      %v345 = vadd.f32 %v247, %v344
      %v346 = vpop.f32.mrf.mxu0
      %v347 = vadd.f32 %v252, %v346
      %v348 = vpop.f32.mrf.mxu0
      %v349 = vadd.f32 %v252, %v348
      %350 = vdwg.mxu0
      %351 = vst [vmem:[%s213] sm:$0xff] %v300
      %352 = vst [vmem:[%s213 + $0x8] sm:$0xff] %v302
      %353 = vst [vmem:[%s213 + $0x10] sm:$0xff] %v343
      %354 = vst [vmem:[%s213 + $0x18] sm:$0xff] %v345
      %355 = vst [vmem:[%s213 + $0x20] sm:$0xff] %v304
      %356 = vst [vmem:[%s213 + $0x28] sm:$0xff] %v306
      %357 = vst [vmem:[%s213 + $0x30] sm:$0xff] %v347
      %358 = vst [vmem:[%s213 + $0x38] sm:$0xff] %v349
      %v359 = vld [vmem:[%s202] sm:$0xff]
      %v360 = vld [vmem:[%s202 + $0x8] sm:$0xff]
      %v361 = vld [vmem:[%s202 + $0x10] sm:$0xff]
      %v362 = vld [vmem:[%s202 + $0x18] sm:$0xff]
      %v363 = vld [vmem:[%s202 + $0x20] sm:$0xff]
      %v364 = vld [vmem:[%s202 + $0x28] sm:$0xff]
      %v365 = vld [vmem:[%s202 + $0x30] sm:$0xff]
      %v366 = vld [vmem:[%s202 + $0x38] sm:$0xff]
      %v367 = vld [vmem:[%s202 + $0x40] sm:$0xff]
      %v368 = vld [vmem:[%s202 + $0x48] sm:$0xff]
      %v369 = vld [vmem:[%s202 + $0x50] sm:$0xff]
      %v370 = vld [vmem:[%s202 + $0x58] sm:$0xff]
      %v371 = vld [vmem:[%s202 + $0x60] sm:$0xff]
      %v372 = vld [vmem:[%s202 + $0x68] sm:$0xff]
      %v373 = vld [vmem:[%s202 + $0x70] sm:$0xff]
      %v374 = vld [vmem:[%s202 + $0x78] sm:$0xff]
      %v375 = vpack.c.bf16 %v363, %v359
      %v376 = vpack.c.bf16 %v364, %v360
      %v377 = vpack.c.bf16 %v365, %v361
      %v378 = vpack.c.bf16 %v366, %v362
      %v379 = vpack.c.bf16 %v371, %v367
      %v380 = vpack.c.bf16 %v372, %v368
      %v381 = vpack.c.bf16 %v373, %v369
      %v382 = vpack.c.bf16 %v374, %v370
      %v383 = vld [vmem:[%s1] sm:$0xf]
      %v384 = vld [vmem:[%s1 + $0x4] sm:$0xf]
      %v387 = vunpack.c.l.b16 %v383
      %v388 = vunpack.c.l.b16 %v384
      %v389 = vpack.c.b16 %v388, %v387
      %v391 = vsel %vm261, %v389, 0
      %393 = vmatprep.subr.bf16.mxu0 0
      %394 = vmatpush1.bf16.msra.mxu0 0
      %395 = vmatprep.subr.bf16.mxu0 0
      %396 = vmatpush1.bf16.msra.mxu0 0
      %397 = vmatprep.subr.bf16.mxu0 0
      %398 = vmatpush1.bf16.msra.mxu0 0
      %399 = vmatprep.subr.bf16.mxu0 0
      %400 = vmatpush1.bf16.msra.mxu0 0
      %401 = vmatprep.subr.bf16.mxu0 0
      %402 = vmatpush1.bf16.msra.mxu0 0
      %403 = vmatprep.subr.bf16.mxu0 0
      %404 = vmatpush1.bf16.msra.mxu0 0
      %405 = vmatprep.subr.bf16.mxu0 %v380
      %406 = vmatpush1.bf16.msra.mxu0 %v379
      %407 = vmatprep.subr.bf16.mxu0 %v376
      %408 = vmatpush1.bf16.msra.mxu0 %v375
      %409 = vmatprep.subr.bf16.mxu0 0
      %410 = vmatpush2.bf16.msra.mxu0 0
      %411 = vmatprep.subr.bf16.mxu0 0
      %412 = vmatpush2.bf16.msra.mxu0 0
      %413 = vmatprep.subr.bf16.mxu0 0
      %414 = vmatpush2.bf16.msra.mxu0 0
      %415 = vmatprep.subr.bf16.mxu0 0
      %416 = vmatpush2.bf16.msra.mxu0 0
      %417 = vmatprep.subr.bf16.mxu0 0
      %418 = vmatpush2.bf16.msra.mxu0 0
      %419 = vmatprep.subr.bf16.mxu0 0
      %420 = vmatpush2.bf16.msra.mxu0 0
      %421 = vmatprep.subr.bf16.mxu0 0
      %422 = vmatpush2.bf16.msra.mxu0 0
      %423 = vmatprep.subr.bf16.mxu0 0
      %424 = vmatpush2.bf16.msra.mxu0 0
      %425 = vmatprep.mubr.bf16.mxu0 0
      %426 = vmatmul.mubr.bf16.gmra.mxu0 %v391
      %v427 = vpop.f32.mrf.mxu0
      %v428 = vadd.f32 %v247, %v427
      %v429 = vpop.f32.mrf.mxu0
      %v430 = vadd.f32 %v247, %v429
      %v431 = vpop.f32.mrf.mxu0
      %v432 = vadd.f32 %v252, %v431
      %v433 = vpop.f32.mrf.mxu0
      %v434 = vadd.f32 %v252, %v433
      %435 = vdwg.mxu0
      %436 = vmatprep.subr.bf16.mxu0 0
      %437 = vmatpush1.bf16.msra.mxu0 0
      %438 = vmatprep.subr.bf16.mxu0 0
      %439 = vmatpush1.bf16.msra.mxu0 0
      %440 = vmatprep.subr.bf16.mxu0 0
      %441 = vmatpush1.bf16.msra.mxu0 0
      %442 = vmatprep.subr.bf16.mxu0 0
      %443 = vmatpush1.bf16.msra.mxu0 0
      %444 = vmatprep.subr.bf16.mxu0 0
      %445 = vmatpush1.bf16.msra.mxu0 0
      %446 = vmatprep.subr.bf16.mxu0 0
      %447 = vmatpush1.bf16.msra.mxu0 0
      %448 = vmatprep.subr.bf16.mxu0 %v382
      %449 = vmatpush1.bf16.msra.mxu0 %v381
      %450 = vmatprep.subr.bf16.mxu0 %v378
      %451 = vmatpush1.bf16.msra.mxu0 %v377
      %452 = vmatprep.subr.bf16.mxu0 0
      %453 = vmatpush2.bf16.msra.mxu0 0
      %454 = vmatprep.subr.bf16.mxu0 0
      %455 = vmatpush2.bf16.msra.mxu0 0
      %456 = vmatprep.subr.bf16.mxu0 0
      %457 = vmatpush2.bf16.msra.mxu0 0
      %458 = vmatprep.subr.bf16.mxu0 0
      %459 = vmatpush2.bf16.msra.mxu0 0
      %460 = vmatprep.subr.bf16.mxu0 0
      %461 = vmatpush2.bf16.msra.mxu0 0
      %462 = vmatprep.subr.bf16.mxu0 0
      %463 = vmatpush2.bf16.msra.mxu0 0
      %464 = vmatprep.subr.bf16.mxu0 0
      %465 = vmatpush2.bf16.msra.mxu0 0
      %466 = vmatprep.subr.bf16.mxu0 0
      %467 = vmatpush2.bf16.msra.mxu0 0
      %468 = vmatprep.mubr.bf16.mxu0 0
      %469 = vmatmul.mubr.bf16.gmra.mxu0 %v391
      %v470 = vpop.f32.mrf.mxu0
      %v471 = vadd.f32 %v247, %v470
      %v472 = vpop.f32.mrf.mxu0
      %v473 = vadd.f32 %v247, %v472
      %v474 = vpop.f32.mrf.mxu0
      %v475 = vadd.f32 %v252, %v474
      %v476 = vpop.f32.mrf.mxu0
      %v477 = vadd.f32 %v252, %v476
      %478 = vdwg.mxu0
      %s479 = scalar_lea.vmem %s213, 64
      %480 = vst [vmem:[%s479] sm:$0xff] %v428
      %481 = vst [vmem:[%s479 + $0x8] sm:$0xff] %v430
      %482 = vst [vmem:[%s479 + $0x10] sm:$0xff] %v471
      %483 = vst [vmem:[%s479 + $0x18] sm:$0xff] %v473
      %484 = vst [vmem:[%s479 + $0x20] sm:$0xff] %v432
      %485 = vst [vmem:[%s479 + $0x28] sm:$0xff] %v434
      %486 = vst [vmem:[%s479 + $0x30] sm:$0xff] %v475
      %487 = vst [vmem:[%s479 + $0x38] sm:$0xff] %v477
      %s488 = smul.u32 2, %s19
      %p489 = scmp.lt.s32.totalorder %s18, 1
      %s490 = scalar_select %p489, %s18, 1
      %p491 = scmp.lt.s32.totalorder %s488, 3
      %s492 = scalar_select %p491, %s488, 3
      %s493 = smul.addr %s492, 8
      %s494 = smul.addr %s490, 32
      %s495 = sadd.s32 %s493, %s494
      %s496 = smul.addr %s495, 8
      %s497 = scalar_lea.vmem %s3, %s496
      // Predicated region
      $region33: #{tlg_attention.5} parent=31 // pred_check
        %p498 = pneg %p116
      $region34: #{tlg_attention.5} parent=31 // pred_check_branch
        %500 = sbr.rel (%p498) target = $region36
      $region35: #{tlg_attention.5} parent=31 // pred_region
        %s501 = smul.u32 2, %s19
      $region36: #{tlg_attention.5} parent=31 // pred_fallthru
        _
    $region32: #{tlg_attention.5} parent=5 // pred_fallthru
      _
    %p502 = scmp.le.s32.totalorder 2, %s9
    // Predicated region
    $region37: #{tlg_attention.5} parent=5 // pred_check
      %p503 = pneg %p502
    $region38: #{tlg_attention.5} parent=5 // pred_check_branch
      %505 = sbr.rel (%p503) target = $region40
    $region39: #{tlg_attention.5} parent=5 // pred_region
      %s506 = ssub.s32 %s9, 2
      // Predicated region
      $region41: #{tlg_attention.5} parent=39 // pred_check
        %p507 = pneg %p122
      $region42: #{tlg_attention.5} parent=39 // pred_check_branch
        %509 = sbr.rel (%p507) target = $region44
      $region43: #{tlg_attention.5} parent=39 // pred_region
        %s510 = smul.u32 2, %s21
        %p511 = scmp.lt.s32.totalorder %s20, 1
        %s512 = scalar_select %p511, %s20, 1
        %p513 = scmp.lt.s32.totalorder %s510, 3
        %s514 = scalar_select %p513, %s510, 3
        %s515 = smul.addr %s514, 8
        %s516 = smul.addr %s512, 32
        %s517 = sadd.s32 %s515, %s516
        %s518 = smul.addr %s517, 8
        %s519 = scalar_lea.vmem %s3, %s518
      $region44: #{tlg_attention.5} parent=39 // pred_fallthru
        _
    $region40: #{tlg_attention.5} parent=5 // pred_fallthru
      _
  $region6: #{tlg_attention.5} parent=0 // loop_footer
    %s13 = sadd.s32 1, %s9
  $region7: #{tlg_attention.5} parent=0 // loop_footer_branch
    %8 = sbr.rel target = $region3
  $region8: #{tlg_attention.5} parent=0 // loop_exit
    _

</llo_original>
